<compile_context>
chip_gen: v5e
topology: v5e:2x2
jax: 0.10.0
libtpu: 0.0.40
codegen_flags: <defaults>
</compile_context>

<pallas_src>
import functools

import numpy as np
import jax
import jax.numpy as jnp
from jax import lax
from jax.experimental import pallas as pl
from jax.experimental.pallas import tpu as pltpu

# ------------------------- small synthetic config -------------------------
HIDDEN = 32
NUM_HEADS = 4
NUM_KV_HEADS = 2
HEAD_DIM = HIDDEN // NUM_HEADS            # 8
FFN = 64                                  # intermediate_size
EPS = 1e-5
ROTARY_PCT = 0.5
ROTARY_DIM = int(HEAD_DIM * ROTARY_PCT)   # 4
ROTARY_BASE = 10000.0

DTYPE = jnp.bfloat16                      # storage / MXU-input dtype (fp32 accumulation inside)

BATCH = 2
SEQ = 8

Q_SIZE = NUM_HEADS * HEAD_DIM             # 32
KV_SIZE = NUM_KV_HEADS * HEAD_DIM         # 16
QKV_SIZE = Q_SIZE + 2 * KV_SIZE           # 64

MLP_ROW_TILE = 256                        # raised from 8 (per-grid-step overhead ~0.35us)
MLP_FFN_TILE = 512                        # FFN column tile (multiple of 256 at real sizes)


# ------------------------------ Pallas kernels ------------------------------
def _attn_block_kernel(x_ref, ln_w_ref, qkv_w_ref, qkv_b_ref,
                       cos_q_ref, sin_q_ref, cos_k_ref, sin_k_ref,
                       dense_w_ref, o_ref, *,
                       num_heads, num_kv_heads, head_dim, eps, scale):
    f32 = jnp.float32
    mxu = qkv_w_ref.dtype

    x = x_ref[0].astype(f32)                                   # (S, H): residual + norm input
    seq = x.shape[0]

    # ---- RMSNorm (fp32 statistics) ----
    var = jnp.mean(x * x, axis=-1, keepdims=True)
    nx = x * lax.rsqrt(var + eps) * ln_w_ref[...].astype(f32)

    # ---- fused QKV projection (+ bias, add_qkv_bias=True) ----
    qkv = jnp.dot(nx.astype(mxu), qkv_w_ref[...], preferred_element_type=f32)
    qkv = qkv + qkv_b_ref[...].astype(f32)                     # (S, Q + 2*KV), stays in VMEM

    q_size = num_heads * head_dim
    kv_size = num_kv_heads * head_dim
    rep = num_heads // num_kv_heads
    hd2 = head_dim // 2
    q2 = q_size // 2
    k2 = kv_size // 2

    q_slab = qkv[:, :q_size]                                   # permuted half-layout (see wrapper)
    k_slab = qkv[:, q_size:q_size + kv_size]
    v_slab = qkv[:, q_size + kv_size:]                         # unpermuted

    # ---- partial interleaved RoPE, applied ONCE per slab ----
    # Weight columns were host-permuted so the rotate-half partner of column c is column
    # c +/- slab_width/2; the rotation sign is folded into the sin table (tail has cos=1, sin=0),
    # so the whole rotation is one lane-slice swap + two elementwise FMAs on a lane-dense slab.
    def rope(t, cos, sin):
        half = t.shape[-1] // 2
        swapped = jnp.concatenate([t[:, half:], t[:, :half]], axis=-1)
        return t * cos + swapped * sin

    q_r = rope(q_slab, cos_q_ref[...], sin_q_ref[...]) * scale   # fold 1/sqrt(D) into q
    k_r = rope(k_slab, cos_k_ref[...], sin_k_ref[...])

    # ---- causal mask for rep query heads stacked along rows: query position = row % S ----
    qpos = lax.broadcasted_iota(jnp.int32, (rep * seq, seq), 0) % seq
    kpos = lax.broadcasted_iota(jnp.int32, (rep * seq, seq), 1)
    causal = kpos <= qpos

    dense_w = dense_w_ref[...]                                  # (H, H)
    attn = jnp.zeros_like(x)                                    # (S, H) fp32 accumulator

    # ---- causal SDPA, batched per kv-group (GQA: rep query heads share one K/V head) ----
    for g in range(num_kv_heads):
        # this group's K / V heads (K gathered from the two permuted halves)
        k_g = jnp.concatenate([k_r[:, g * hd2:(g + 1) * hd2],
                               k_r[:, k2 + g * hd2:k2 + (g + 1) * hd2]],
                              axis=-1).astype(mxu)              # (S, D)
        v_g = v_slab[:, g * head_dim:(g + 1) * head_dim].astype(mxu)   # (S, D)

        # stack the group's rep query heads along rows -> ONE score matmul per group
        q_heads = []
        for r in range(rep):
            h = g * rep + r
            q_heads.append(jnp.concatenate([q_r[:, h * hd2:(h + 1) * hd2],
                                            q_r[:, q2 + h * hd2:q2 + (h + 1) * hd2]],
                                           axis=-1))            # (S, D)
        q_g = jnp.concatenate(q_heads, axis=0).astype(mxu)      # (rep*S, D)

        s = lax.dot_general(q_g, k_g, (((1,), (1,)), ((), ())),
                            preferred_element_type=f32)         # (rep*S, S)
        s = jnp.where(causal, s, jnp.float32(-1e30))            # causal rows always have >=1 key
        m = jnp.max(s, axis=-1, keepdims=True)
        p = jnp.exp(s - m)
        denom = jnp.sum(p, axis=-1, keepdims=True)
        ctx = jnp.dot(p.astype(mxu), v_g, preferred_element_type=f32)   # (rep*S, D), K=S
        # normalize ctx (S*rep, D) instead of the (rep*S, S) probability matrix
        ctx = ctx * pl.reciprocal(denom, approx=True)

        # re-assemble (S, rep*D) and fold the dense projection for this group (K = rep*D)
        ctx_2d = jnp.concatenate([ctx[r * seq:(r + 1) * seq, :] for r in range(rep)], axis=-1)
        w_g = dense_w[g * rep * head_dim:(g + 1) * rep * head_dim, :]
        attn = attn + jnp.dot(ctx_2d.astype(mxu), w_g, preferred_element_type=f32)

    # dense has no bias (add_bias_linear=False); residual = hidden_states (pre-norm input)
    o_ref[0] = (x + attn).astype(o_ref.dtype)


def _mlp_block_kernel(x_ref, ln_w_ref, fcx_w_ref, fcg_w_ref, proj_w_ref, o_ref, acc_ref, *, eps):
    f32 = jnp.float32
    mxu = fcx_w_ref.dtype
    j = pl.program_id(1)

    x = x_ref[...].astype(f32)                                  # (TM, H): residual (norm_input)

    @pl.when(j == 0)
    def _():
        acc_ref[...] = x                                        # start accumulator with residual

    var = jnp.mean(x * x, axis=-1, keepdims=True)
    nx = (x * lax.rsqrt(var + eps) * ln_w_ref[...].astype(f32)).astype(mxu)

    a = jnp.dot(nx, fcx_w_ref[...], preferred_element_type=f32)   # (TM, TN): "x" half of fc
    g = jnp.dot(nx, fcg_w_ref[...], preferred_element_type=f32)   # (TM, TN): gate half of fc
    # TRT-LLM swiglu (tensorrt_llm.functional.swiglu): silu(gate) * x
    act = (a * (g * jax.nn.sigmoid(g))).astype(mxu)

    acc_ref[...] += jnp.dot(act, proj_w_ref[...], preferred_element_type=f32)  # (TM, H), no bias

    @pl.when(j == pl.num_programs(1) - 1)
    def _():
        o_ref[...] = acc_ref[...].astype(o_ref.dtype)


# ------------------------------ wrapper / glue ------------------------------
def _qk_half_layout_perm(num_heads, head_dim, rot_dim):
    """Column permutation: per head, de-interleave rotary pairs and split the head into two
    halves; globally lay out [all heads' first halves | all heads' second halves] so the RoPE
    rotate-half swap is a single lane-slice swap of the whole slab."""
    rh = rot_dim // 2
    first, second = [], []
    for h in range(num_heads):
        base = h * head_dim
        even = [base + 2 * j for j in range(rh)]
        odd = [base + 2 * j + 1 for j in range(rh)]
        tail = list(range(base + rot_dim, base + head_dim))
        half_tail = len(tail) // 2
        first += even + tail[:half_tail]
        second += odd + tail[half_tail:]
    return np.asarray(first + second, dtype=np.int32)


def _rope_tables_half(seq, head_dim, rot_dim, base, num_heads):
    """cos/sin tables matching the half layout; sign folded into sin, tails cos=1 / sin=0."""
    hd2 = head_dim // 2
    rh = rot_dim // 2
    inv_freq = 1.0 / (base ** (jnp.arange(rh, dtype=jnp.float32) / rh))
    pos = jnp.arange(seq, dtype=jnp.float32)
    freqs = pos[:, None] * inv_freq[None, :]                    # (S, rot_dim/2)
    pad = jnp.zeros((seq, hd2 - rh), jnp.float32)
    cos_half = jnp.concatenate([jnp.cos(freqs), 1.0 + pad], axis=-1)   # (S, head_dim/2)
    sin_half = jnp.concatenate([jnp.sin(freqs), pad], axis=-1)
    cos = jnp.tile(cos_half, (1, 2 * num_heads))                # (S, num_heads*head_dim)
    sin = jnp.concatenate([jnp.tile(-sin_half, (1, num_heads)),
                           jnp.tile(sin_half, (1, num_heads))], axis=-1)
    return cos, sin


def init_params(key):
    keys = jax.random.split(key, 5)
    s = 0.02
    return dict(
        input_ln_w=jnp.ones((HIDDEN,), DTYPE),
        post_ln_w=jnp.ones((HIDDEN,), DTYPE),
        qkv_w=(jax.random.normal(keys[0], (HIDDEN, QKV_SIZE)) * s).astype(DTYPE),
        qkv_b=(jax.random.normal(keys[1], (QKV_SIZE,)) * s).astype(DTYPE),   # add_qkv_bias=True
        # add_bias_linear=False -> dense/fc/proj carry NO bias parameters at all
        dense_w=(jax.random.normal(keys[2], (HIDDEN, HIDDEN)) * s).astype(DTYPE),
        fc_w=(jax.random.normal(keys[3], (HIDDEN, 2 * FFN)) * s).astype(DTYPE),
        proj_w=(jax.random.normal(keys[4], (FFN, HIDDEN)) * s).astype(DTYPE),
    )


def chatglm_decoder_layer(hidden_states, params):
    """hidden_states: (B, S, HIDDEN) -> (B, S, HIDDEN)."""
    B, S, H = hidden_states.shape
    dtype = hidden_states.dtype
    itemsize = jnp.dtype(dtype).itemsize
    scale = 1.0 / (HEAD_DIM ** 0.5)

    # ---- one-time host-side weight prep (offline at real sizes): RoPE half-layout permutation ----
    perm_q = _qk_half_layout_perm(NUM_HEADS, HEAD_DIM, ROTARY_DIM)
    perm_k = _qk_half_layout_perm(NUM_KV_HEADS, HEAD_DIM, ROTARY_DIM) + Q_SIZE
    perm_v = np.arange(KV_SIZE, dtype=np.int32) + Q_SIZE + KV_SIZE
    full_perm = np.concatenate([perm_q, perm_k, perm_v])
    qkv_w = params["qkv_w"][:, full_perm]
    qkv_b = params["qkv_b"][full_perm].reshape(1, QKV_SIZE)

    cos_q, sin_q = _rope_tables_half(S, HEAD_DIM, ROTARY_DIM, ROTARY_BASE, NUM_HEADS)
    cos_k, sin_k = _rope_tables_half(S, HEAD_DIM, ROTARY_DIM, ROTARY_BASE, NUM_KV_HEADS)

    ln1 = params["input_ln_w"].reshape(1, H)
    ln2 = params["post_ln_w"].reshape(1, H)

    # ---------------- kernel 1: fused attention block (per-batch grid) ----------------
    attn_cost = pl.CostEstimate(
        flops=int(B * (2 * S * H * QKV_SIZE
                       + 4 * NUM_HEADS * S * S * HEAD_DIM
                       + 2 * S * Q_SIZE * H)),
        transcendentals=int(B * NUM_HEADS * S * S),
        bytes_accessed=int(2 * B * S * H * itemsize
                           + (H * QKV_SIZE + QKV_SIZE + H * H) * itemsize
                           + 2 * S * (Q_SIZE + KV_SIZE) * 4),
    )
    norm_input = pl.pallas_call(
        functools.partial(_attn_block_kernel, num_heads=NUM_HEADS,
                          num_kv_heads=NUM_KV_HEADS, head_dim=HEAD_DIM,
                          eps=EPS, scale=scale),
        out_shape=jax.ShapeDtypeStruct((B, S, H), dtype),
        grid=(B,),
        in_specs=[
            pl.BlockSpec((1, S, H), lambda b: (b, 0, 0)),        # hidden_states
            pl.BlockSpec((1, H), lambda b: (0, 0)),              # input_ln_w
            pl.BlockSpec((H, QKV_SIZE), lambda b: (0, 0)),       # qkv_w (permuted)
            pl.BlockSpec((1, QKV_SIZE), lambda b: (0, 0)),       # qkv_b (permuted)
            pl.BlockSpec((S, Q_SIZE), lambda b: (0, 0)),         # cos_q
            pl.BlockSpec((S, Q_SIZE), lambda b: (0, 0)),         # sin_q (sign folded)
            pl.BlockSpec((S, KV_SIZE), lambda b: (0, 0)),        # cos_k
            pl.BlockSpec((S, KV_SIZE), lambda b: (0, 0)),        # sin_k
            pl.BlockSpec((H, H), lambda b: (0, 0)),              # dense_w
        ],
        out_specs=pl.BlockSpec((1, S, H), lambda b: (b, 0, 0)),
        compiler_params=pltpu.CompilerParams(dimension_semantics=("parallel",)),
        cost_estimate=attn_cost,
    )(hidden_states, ln1, qkv_w, qkv_b, cos_q, sin_q, cos_k, sin_k, params["dense_w"])

    # ---------------- kernel 2: fused MLP block (row tiles x FFN-column tiles) ----------------
    M = B * S
    tm = min(MLP_ROW_TILE, M)
    tn = min(MLP_FFN_TILE, FFN)
    x2d = norm_input.reshape(M, H)
    fcx_w = params["fc_w"][:, :FFN]                              # "x" half of fc
    fcg_w = params["fc_w"][:, FFN:]                              # gate half of fc
    mlp_cost = pl.CostEstimate(
        flops=int(6 * M * H * FFN),
        transcendentals=int(M * FFN),
        bytes_accessed=int(2 * M * H * itemsize + 3 * H * FFN * itemsize),
    )
    out2d = pl.pallas_call(
        functools.partial(_mlp_block_kernel, eps=EPS),
        out_shape=jax.ShapeDtypeStruct((M, H), dtype),
        grid=(pl.cdiv(M, tm), pl.cdiv(FFN, tn)),                 # FFN (reduction) axis last
        in_specs=[
            pl.BlockSpec((tm, H), lambda i, j: (i, 0)),          # norm_input rows (residual)
            pl.BlockSpec((1, H), lambda i, j: (0, 0)),           # post_ln_w
            pl.BlockSpec((H, tn), lambda i, j: (0, j)),          # fc "x" columns
            pl.BlockSpec((H, tn), lambda i, j: (0, j)),          # fc gate columns
            pl.BlockSpec((tn, H), lambda i, j: (j, 0)),          # proj rows
        ],
        out_specs=pl.BlockSpec((tm, H), lambda i, j: (i, 0)),
        scratch_shapes=[pltpu.VMEM((tm, H), jnp.float32)],       # fp32 accumulator over FFN tiles
        compiler_params=pltpu.CompilerParams(
            dimension_semantics=("parallel", "arbitrary")),
        cost_estimate=mlp_cost,
        input_output_aliases={0: 0},                             # norm_input updated in place
    )(x2d, ln2, fcx_w, fcg_w, params["proj_w"])

    return out2d.reshape(B, S, H)


if __name__ == "__main__":
    key = jax.random.PRNGKey(0)
    k_x, k_p = jax.random.split(key)
    x = jax.random.normal(k_x, (BATCH, SEQ, HIDDEN)).astype(DTYPE)
    params = init_params(k_p)

    layer = jax.jit(chatglm_decoder_layer)
    out = layer(x, params)
    out = jax.block_until_ready(out)
    assert out.shape == (BATCH, SEQ, HIDDEN)
    assert bool(jnp.all(jnp.isfinite(out.astype(jnp.float32))))
    print("KERNEL_OK")
</pallas_src>

<mosaic_0001>
module attributes {stable_mosaic.version = 11 : i64} {
  func.func @_mlp_block_kernel(%arg0: i32, %arg1: i32, %arg2: memref<16x32xbf16, #tpu.memory_space<vmem>>, %arg3: memref<1x32xbf16, #tpu.memory_space<vmem>>, %arg4: memref<32x64xbf16, #tpu.memory_space<vmem>>, %arg5: memref<32x64xbf16, #tpu.memory_space<vmem>>, %arg6: memref<64x32xbf16, #tpu.memory_space<vmem>>, %arg7: memref<16x32xbf16, #tpu.memory_space<vmem>>, %arg8: memref<16x32xf32, #tpu.memory_space<vmem>>) attributes {dimension_semantics = [#tpu.dimension_semantics<parallel>, #tpu.dimension_semantics<arbitrary>], iteration_bounds = array<i64: 1, 1>, scalar_prefetch = 0 : i64, scratch_operands = 1 : i64, tpu.core_type = #tpu.core_type<tc>, window_params = [{transform_indices = @transform_0, window_bounds = array<i64: 16, 32>}, {pipeline_mode = #tpu.pipeline_mode<synchronous>, transform_indices = @transform_1, window_bounds = array<i64: 1, 32>}, {transform_indices = @transform_2, window_bounds = array<i64: 32, 64>}, {transform_indices = @transform_3, window_bounds = array<i64: 32, 64>}, {transform_indices = @transform_4, window_bounds = array<i64: 64, 32>}, {transform_indices = @transform_5, window_bounds = array<i64: 16, 32>}]} {
    %c0 = arith.constant 0 : index
    %c0_0 = arith.constant 0 : index
    %0 = vector.load %arg2[%c0, %c0_0] : memref<16x32xbf16, #tpu.memory_space<vmem>>, vector<16x32xbf16>
    %1 = arith.extf %0 : vector<16x32xbf16> to vector<16x32xf32>
    %c0_i32 = arith.constant 0 : i32
    %2 = arith.cmpi eq, %arg1, %c0_i32 : i32
    %3 = arith.extui %2 : i1 to i32
    %c0_i32_1 = arith.constant 0 : i32
    %4 = arith.cmpi ne, %3, %c0_i32_1 : i32
    scf.if %4 {
      %c0_22 = arith.constant 0 : index
      %c0_23 = arith.constant 0 : index
      %40 = vector.load %arg8[%c0_22, %c0_23] : memref<16x32xf32, #tpu.memory_space<vmem>>, vector<16x32xf32>
      tpu.vector_store %arg8[%c0_22, %c0_23], %1 {strides = array<i32>} : memref<16x32xf32, #tpu.memory_space<vmem>>, vector<16x32xf32>,
    } else {
    }
    %5 = arith.mulf %1, %1 : vector<16x32xf32>
    %cst = arith.constant dense<0.000000e+00> : vector<16xf32>
    %6 = vector.multi_reduction <add>, %5, %cst [1] : vector<16x32xf32> to vector<16xf32>
    %7 = vector.shape_cast %6 : vector<16xf32> to vector<16x1xf32>
    %cst_2 = arith.constant 3.200000e+01 : f32
    %8 = vector.broadcast %cst_2 : f32 to vector<16x1xf32>
    %9 = arith.divf %7, %8 : vector<16x1xf32>
    %cst_3 = arith.constant 9.99999974E-6 : f32
    %10 = vector.broadcast %cst_3 : f32 to vector<16x1xf32>
    %11 = arith.addf %9, %10 : vector<16x1xf32>
    %12 = math.rsqrt %11 : vector<16x1xf32>
    %13 = vector.broadcast %12 : vector<16x1xf32> to vector<16x32xf32>
    %14 = arith.mulf %1, %13 : vector<16x32xf32>
    %c0_4 = arith.constant 0 : index
    %c0_5 = arith.constant 0 : index
    %15 = vector.load %arg3[%c0_4, %c0_5] : memref<1x32xbf16, #tpu.memory_space<vmem>>, vector<1x32xbf16>
    %16 = arith.extf %15 : vector<1x32xbf16> to vector<1x32xf32>
    %17 = vector.broadcast %16 : vector<1x32xf32> to vector<16x32xf32>
    %18 = arith.mulf %14, %17 : vector<16x32xf32>
    %19 = arith.truncf %18 : vector<16x32xf32> to vector<16x32xbf16>
    %c0_6 = arith.constant 0 : index
    %c0_7 = arith.constant 0 : index
    %20 = vector.load %arg4[%c0_6, %c0_7] : memref<32x64xbf16, #tpu.memory_space<vmem>>, vector<32x64xbf16>
    %cst_8 = arith.constant dense<0.000000e+00> : vector<16x64xf32>
    %21 = tpu.matmul %19, %20, %cst_8 {dimension_numbers = #tpu.dot_dimension_numbers<[1], [0], [0], [1], [0, 0, 1, 1], [], []>} : vector<16x32xbf16>, vector<32x64xbf16>, vector<16x64xf32> -> vector<16x64xf32>
    %c0_9 = arith.constant 0 : index
    %c0_10 = arith.constant 0 : index
    %22 = vector.load %arg5[%c0_9, %c0_10] : memref<32x64xbf16, #tpu.memory_space<vmem>>, vector<32x64xbf16>
    %cst_11 = arith.constant dense<0.000000e+00> : vector<16x64xf32>
    %23 = tpu.matmul %19, %22, %cst_11 {dimension_numbers = #tpu.dot_dimension_numbers<[1], [0], [0], [1], [0, 0, 1, 1], [], []>} : vector<16x32xbf16>, vector<32x64xbf16>, vector<16x64xf32> -> vector<16x64xf32>
    %24 = arith.negf %23 : vector<16x64xf32>
    %25 = math.exp %24 : vector<16x64xf32>
    %cst_12 = arith.constant 1.000000e+00 : f32
    %26 = vector.broadcast %cst_12 : f32 to vector<16x64xf32>
    %27 = arith.addf %26, %25 : vector<16x64xf32>
    %28 = arith.divf %26, %27 : vector<16x64xf32>
    %29 = arith.mulf %23, %28 : vector<16x64xf32>
    %30 = arith.mulf %21, %29 : vector<16x64xf32>
    %31 = arith.truncf %30 : vector<16x64xf32> to vector<16x64xbf16>
    %c0_13 = arith.constant 0 : index
    %c0_14 = arith.constant 0 : index
    %32 = vector.load %arg8[%c0_13, %c0_14] : memref<16x32xf32, #tpu.memory_space<vmem>>, vector<16x32xf32>
    %c0_15 = arith.constant 0 : index
    %c0_16 = arith.constant 0 : index
    %33 = vector.load %arg6[%c0_15, %c0_16] : memref<64x32xbf16, #tpu.memory_space<vmem>>, vector<64x32xbf16>
    %cst_17 = arith.constant dense<0.000000e+00> : vector<16x32xf32>
    %34 = tpu.matmul %31, %33, %cst_17 {dimension_numbers = #tpu.dot_dimension_numbers<[1], [0], [0], [1], [0, 0, 1, 1], [], []>} : vector<16x64xbf16>, vector<64x32xbf16>, vector<16x32xf32> -> vector<16x32xf32>
    %35 = arith.addf %32, %34 : vector<16x32xf32>
    %c0_18 = arith.constant 0 : index
    %c0_19 = arith.constant 0 : index
    %36 = vector.load %arg8[%c0_18, %c0_19] : memref<16x32xf32, #tpu.memory_space<vmem>>, vector<16x32xf32>
    tpu.vector_store %arg8[%c0_18, %c0_19], %35 {strides = array<i32>} : memref<16x32xf32, #tpu.memory_space<vmem>>, vector<16x32xf32>,
    %c0_i32_20 = arith.constant 0 : i32
    %37 = arith.cmpi eq, %arg1, %c0_i32_20 : i32
    %38 = arith.extui %37 : i1 to i32
    %c0_i32_21 = arith.constant 0 : i32
    %39 = arith.cmpi ne, %38, %c0_i32_21 : i32
    scf.if %39 {
      %c0_22 = arith.constant 0 : index
      %c0_23 = arith.constant 0 : index
      %40 = vector.load %arg8[%c0_22, %c0_23] : memref<16x32xf32, #tpu.memory_space<vmem>>, vector<16x32xf32>
      %41 = arith.truncf %40 : vector<16x32xf32> to vector<16x32xbf16>
      %c0_24 = arith.constant 0 : index
      %c0_25 = arith.constant 0 : index
      %42 = vector.load %arg7[%c0_24, %c0_25] : memref<16x32xbf16, #tpu.memory_space<vmem>>, vector<16x32xbf16>
      tpu.vector_store %arg7[%c0_24, %c0_25], %41 {strides = array<i32>} : memref<16x32xbf16, #tpu.memory_space<vmem>>, vector<16x32xbf16>,
    } else {
    }
    return
  }
  func.func @transform_0(%arg0: i32, %arg1: i32) -> (i32, i32) {
    %c0_i32 = arith.constant 0 : i32
    %c0_i32_0 = arith.constant 0 : i32
    return %arg0, %c0_i32 : i32, i32
  }
  func.func @transform_1(%arg0: i32, %arg1: i32) -> (i32, i32) {
    %c0_i32 = arith.constant 0 : i32
    %c0_i32_0 = arith.constant 0 : i32
    %c0_i32_1 = arith.constant 0 : i32
    return %c0_i32, %c0_i32_0 : i32, i32
  }
  func.func @transform_2(%arg0: i32, %arg1: i32) -> (i32, i32) {
    %c0_i32 = arith.constant 0 : i32
    %c0_i32_0 = arith.constant 0 : i32
    return %c0_i32, %arg1 : i32, i32
  }
  func.func @transform_3(%arg0: i32, %arg1: i32) -> (i32, i32) {
    %c0_i32 = arith.constant 0 : i32
    %c0_i32_0 = arith.constant 0 : i32
    return %c0_i32, %arg1 : i32, i32
  }
  func.func @transform_4(%arg0: i32, %arg1: i32) -> (i32, i32) {
    %c0_i32 = arith.constant 0 : i32
    %c0_i32_0 = arith.constant 0 : i32
    return %arg1, %c0_i32 : i32, i32
  }
  func.func @transform_5(%arg0: i32, %arg1: i32) -> (i32, i32) {
    %c0_i32 = arith.constant 0 : i32
    %c0_i32_0 = arith.constant 0 : i32
    return %arg0, %c0_i32 : i32, i32
  }
}

module attributes {stable_mosaic.version = 11 : i64} {
  func.func @_attn_block_kernel(%arg0: i32, %arg1: memref<1x8x32xbf16, #tpu.memory_space<vmem>>, %arg2: memref<1x32xbf16, #tpu.memory_space<vmem>>, %arg3: memref<32x64xbf16, #tpu.memory_space<vmem>>, %arg4: memref<1x64xbf16, #tpu.memory_space<vmem>>, %arg5: memref<8x32xf32, #tpu.memory_space<vmem>>, %arg6: memref<8x32xf32, #tpu.memory_space<vmem>>, %arg7: memref<8x16xf32, #tpu.memory_space<vmem>>, %arg8: memref<8x16xf32, #tpu.memory_space<vmem>>, %arg9: memref<32x32xbf16, #tpu.memory_space<vmem>>, %arg10: memref<1x8x32xbf16, #tpu.memory_space<vmem>>) attributes {dimension_semantics = [#tpu.dimension_semantics<parallel>], iteration_bounds = array<i64: 2>, scalar_prefetch = 0 : i64, scratch_operands = 0 : i64, tpu.core_type = #tpu.core_type<tc>, window_params = [{transform_indices = @transform_0, window_bounds = array<i64: 1, 8, 32>}, {pipeline_mode = #tpu.pipeline_mode<synchronous>, transform_indices = @transform_1, window_bounds = array<i64: 1, 32>}, {pipeline_mode = #tpu.pipeline_mode<synchronous>, transform_indices = @transform_2, window_bounds = array<i64: 32, 64>}, {pipeline_mode = #tpu.pipeline_mode<synchronous>, transform_indices = @transform_3, window_bounds = array<i64: 1, 64>}, {pipeline_mode = #tpu.pipeline_mode<synchronous>, transform_indices = @transform_4, window_bounds = array<i64: 8, 32>}, {pipeline_mode = #tpu.pipeline_mode<synchronous>, transform_indices = @transform_5, window_bounds = array<i64: 8, 32>}, {pipeline_mode = #tpu.pipeline_mode<synchronous>, transform_indices = @transform_6, window_bounds = array<i64: 8, 16>}, {pipeline_mode = #tpu.pipeline_mode<synchronous>, transform_indices = @transform_7, window_bounds = array<i64: 8, 16>}, {pipeline_mode = #tpu.pipeline_mode<synchronous>, transform_indices = @transform_8, window_bounds = array<i64: 32, 32>}, {transform_indices = @transform_9, window_bounds = array<i64: 1, 8, 32>}]} {
    %c0 = arith.constant 0 : index
    %c0_0 = arith.constant 0 : index
    %c0_1 = arith.constant 0 : index
    %0 = vector.load %arg1[%c0, %c0_0, %c0_1] : memref<1x8x32xbf16, #tpu.memory_space<vmem>>, vector<1x8x32xbf16>
    %1 = vector.shape_cast %0 : vector<1x8x32xbf16> to vector<8x32xbf16>
    %2 = arith.extf %1 : vector<8x32xbf16> to vector<8x32xf32>
    %3 = arith.mulf %2, %2 : vector<8x32xf32>
    %cst = arith.constant dense<0.000000e+00> : vector<8xf32>
    %4 = vector.multi_reduction <add>, %3, %cst [1] : vector<8x32xf32> to vector<8xf32>
    %5 = vector.shape_cast %4 : vector<8xf32> to vector<8x1xf32>
    %cst_2 = arith.constant 3.200000e+01 : f32
    %6 = vector.broadcast %cst_2 : f32 to vector<8x1xf32>
    %7 = arith.divf %5, %6 : vector<8x1xf32>
    %cst_3 = arith.constant 9.99999974E-6 : f32
    %8 = vector.broadcast %cst_3 : f32 to vector<8x1xf32>
    %9 = arith.addf %7, %8 : vector<8x1xf32>
    %10 = math.rsqrt %9 : vector<8x1xf32>
    %11 = vector.broadcast %10 : vector<8x1xf32> to vector<8x32xf32>
    %12 = arith.mulf %2, %11 : vector<8x32xf32>
    %c0_4 = arith.constant 0 : index
    %c0_5 = arith.constant 0 : index
    %13 = vector.load %arg2[%c0_4, %c0_5] : memref<1x32xbf16, #tpu.memory_space<vmem>>, vector<1x32xbf16>
    %14 = arith.extf %13 : vector<1x32xbf16> to vector<1x32xf32>
    %15 = vector.broadcast %14 : vector<1x32xf32> to vector<8x32xf32>
    %16 = arith.mulf %12, %15 : vector<8x32xf32>
    %17 = arith.truncf %16 : vector<8x32xf32> to vector<8x32xbf16>
    %c0_6 = arith.constant 0 : index
    %c0_7 = arith.constant 0 : index
    %18 = vector.load %arg3[%c0_6, %c0_7] : memref<32x64xbf16, #tpu.memory_space<vmem>>, vector<32x64xbf16>
    %cst_8 = arith.constant dense<0.000000e+00> : vector<8x64xf32>
    %19 = tpu.matmul %17, %18, %cst_8 {dimension_numbers = #tpu.dot_dimension_numbers<[1], [0], [0], [1], [0, 0, 1, 1], [], []>} : vector<8x32xbf16>, vector<32x64xbf16>, vector<8x64xf32> -> vector<8x64xf32>
    %c0_9 = arith.constant 0 : index
    %c0_10 = arith.constant 0 : index
    %20 = vector.load %arg4[%c0_9, %c0_10] : memref<1x64xbf16, #tpu.memory_space<vmem>>, vector<1x64xbf16>
    %21 = arith.extf %20 : vector<1x64xbf16> to vector<1x64xf32>
    %22 = vector.broadcast %21 : vector<1x64xf32> to vector<8x64xf32>
    %23 = arith.addf %19, %22 : vector<8x64xf32>
    %24 = vector.extract_strided_slice %23 {offsets = [0, 0], sizes = [8, 32], strides = [1, 1]} : vector<8x64xf32> to vector<8x32xf32>
    %25 = vector.extract_strided_slice %23 {offsets = [0, 32], sizes = [8, 16], strides = [1, 1]} : vector<8x64xf32> to vector<8x16xf32>
    %26 = vector.extract_strided_slice %23 {offsets = [0, 48], sizes = [8, 16], strides = [1, 1]} : vector<8x64xf32> to vector<8x16xf32>
    %c0_11 = arith.constant 0 : index
    %c0_12 = arith.constant 0 : index
    %27 = vector.load %arg5[%c0_11, %c0_12] : memref<8x32xf32, #tpu.memory_space<vmem>>, vector<8x32xf32>
    %c0_13 = arith.constant 0 : index
    %c0_14 = arith.constant 0 : index
    %28 = vector.load %arg6[%c0_13, %c0_14] : memref<8x32xf32, #tpu.memory_space<vmem>>, vector<8x32xf32>
    %29 = vector.extract_strided_slice %24 {offsets = [0, 16], sizes = [8, 16], strides = [1, 1]} : vector<8x32xf32> to vector<8x16xf32>
    %30 = vector.extract_strided_slice %24 {offsets = [0, 0], sizes = [8, 16], strides = [1, 1]} : vector<8x32xf32> to vector<8x16xf32>
    %31 = tpu.concatenate %29, %30 in 1 : vector<8x16xf32>, vector<8x16xf32> -> vector<8x32xf32>
    %32 = arith.mulf %24, %27 : vector<8x32xf32>
    %33 = arith.mulf %31, %28 : vector<8x32xf32>
    %34 = arith.addf %32, %33 : vector<8x32xf32>
    %cst_15 = arith.constant 0.353553385 : f32
    %35 = vector.broadcast %cst_15 : f32 to vector<8x32xf32>
    %36 = arith.mulf %34, %35 : vector<8x32xf32>
    %c0_16 = arith.constant 0 : index
    %c0_17 = arith.constant 0 : index
    %37 = vector.load %arg7[%c0_16, %c0_17] : memref<8x16xf32, #tpu.memory_space<vmem>>, vector<8x16xf32>
    %c0_18 = arith.constant 0 : index
    %c0_19 = arith.constant 0 : index
    %38 = vector.load %arg8[%c0_18, %c0_19] : memref<8x16xf32, #tpu.memory_space<vmem>>, vector<8x16xf32>
    %39 = vector.extract_strided_slice %25 {offsets = [0, 8], sizes = [8, 8], strides = [1, 1]} : vector<8x16xf32> to vector<8x8xf32>
    %40 = vector.extract_strided_slice %25 {offsets = [0, 0], sizes = [8, 8], strides = [1, 1]} : vector<8x16xf32> to vector<8x8xf32>
    %41 = tpu.concatenate %39, %40 in 1 : vector<8x8xf32>, vector<8x8xf32> -> vector<8x16xf32>
    %42 = arith.mulf %25, %37 : vector<8x16xf32>
    %43 = arith.mulf %41, %38 : vector<8x16xf32>
    %44 = arith.addf %42, %43 : vector<8x16xf32>
    %45 = tpu.iota {dimensions = array<i32: 0>} : vector<16x8xi32>
    %c8_i32 = arith.constant 8 : i32
    %c0_i32 = arith.constant 0 : i32
    %46 = arith.cmpi eq, %c8_i32, %c0_i32 : i32
    %c1_i32 = arith.constant 1 : i32
    %47 = arith.select %46, %c1_i32, %c8_i32 : i32
    %48 = vector.broadcast %47 : i32 to vector<16x8xi32>
    %49 = arith.remsi %45, %48 : vector<16x8xi32>
    %c0_i32_20 = arith.constant 0 : i32
    %50 = vector.broadcast %c0_i32_20 : i32 to vector<16x8xi32>
    %51 = arith.cmpi ne, %49, %50 : vector<16x8xi32>
    %c0_i32_21 = arith.constant 0 : i32
    %52 = vector.broadcast %c0_i32_21 : i32 to vector<16x8xi32>
    %53 = arith.cmpi slt, %49, %52 : vector<16x8xi32>
    %c0_i32_22 = arith.constant 0 : i32
    %54 = arith.cmpi slt, %47, %c0_i32_22 : i32
    %55 = vector.broadcast %54 : i1 to vector<16x8xi1>
    %56 = vector.broadcast %55 : vector<16x8xi1> to vector<16x8xi1>
    %57 = arith.xori %53, %56 : vector<16x8xi1>
    %58 = arith.andi %57, %51 : vector<16x8xi1>
    %59 = vector.broadcast %47 : i32 to vector<16x8xi32>
    %60 = arith.addi %49, %59 : vector<16x8xi32>
    %61 = arith.select %58, %60, %49 : vector<16x8xi1>, vector<16x8xi32>
    %62 = tpu.iota {dimensions = array<i32: 1>} : vector<16x8xi32>
    %63 = arith.cmpi sle, %62, %61 : vector<16x8xi32>
    %c0_23 = arith.constant 0 : index
    %c0_24 = arith.constant 0 : index
    %64 = vector.load %arg9[%c0_23, %c0_24] : memref<32x32xbf16, #tpu.memory_space<vmem>>, vector<32x32xbf16>
    %cst_25 = arith.constant 0.000000e+00 : f32
    %65 = vector.broadcast %cst_25 : f32 to vector<8x32xf32>
    %66 = vector.extract_strided_slice %44 {offsets = [0, 0], sizes = [8, 4], strides = [1, 1]} : vector<8x16xf32> to vector<8x4xf32>
    %67 = vector.extract_strided_slice %44 {offsets = [0, 8], sizes = [8, 4], strides = [1, 1]} : vector<8x16xf32> to vector<8x4xf32>
    %68 = tpu.concatenate %66, %67 in 1 : vector<8x4xf32>, vector<8x4xf32> -> vector<8x8xf32>
    %69 = arith.truncf %68 : vector<8x8xf32> to vector<8x8xbf16>
    %70 = vector.extract_strided_slice %26 {offsets = [0, 0], sizes = [8, 8], strides = [1, 1]} : vector<8x16xf32> to vector<8x8xf32>
    %71 = arith.truncf %70 : vector<8x8xf32> to vector<8x8xbf16>
    %72 = vector.extract_strided_slice %36 {offsets = [0, 0], sizes = [8, 4], strides = [1, 1]} : vector<8x32xf32> to vector<8x4xf32>
    %73 = vector.extract_strided_slice %36 {offsets = [0, 16], sizes = [8, 4], strides = [1, 1]} : vector<8x32xf32> to vector<8x4xf32>
    %74 = tpu.concatenate %72, %73 in 1 : vector<8x4xf32>, vector<8x4xf32> -> vector<8x8xf32>
    %75 = vector.extract_strided_slice %36 {offsets = [0, 4], sizes = [8, 4], strides = [1, 1]} : vector<8x32xf32> to vector<8x4xf32>
    %76 = vector.extract_strided_slice %36 {offsets = [0, 20], sizes = [8, 4], strides = [1, 1]} : vector<8x32xf32> to vector<8x4xf32>
    %77 = tpu.concatenate %75, %76 in 1 : vector<8x4xf32>, vector<8x4xf32> -> vector<8x8xf32>
    %78 = tpu.concatenate %74, %77 in 0 : vector<8x8xf32>, vector<8x8xf32> -> vector<16x8xf32>
    %79 = arith.truncf %78 : vector<16x8xf32> to vector<16x8xbf16>
    %cst_26 = arith.constant dense<0.000000e+00> : vector<16x8xf32>
    %80 = tpu.matmul %79, %69, %cst_26 {dimension_numbers = #tpu.dot_dimension_numbers<[1], [1], [0], [0], [0, 0, 1, 0], [], []>} : vector<16x8xbf16>, vector<8x8xbf16>, vector<16x8xf32> -> vector<16x8xf32>
    %cst_27 = arith.constant -1.000000e+30 : f32
    %81 = vector.broadcast %cst_27 : f32 to vector<16x8xf32>
    %82 = arith.select %63, %80, %81 : vector<16x8xi1>, vector<16x8xf32>
    %cst_28 = arith.constant dense<0xFF800000> : vector<16xf32>
    %83 = vector.multi_reduction <maximumf>, %82, %cst_28 [1] : vector<16x8xf32> to vector<16xf32>
    %84 = vector.shape_cast %83 : vector<16xf32> to vector<16x1xf32>
    %85 = vector.broadcast %84 : vector<16x1xf32> to vector<16x8xf32>
    %86 = arith.subf %82, %85 : vector<16x8xf32>
    %87 = math.exp %86 : vector<16x8xf32>
    %cst_29 = arith.constant dense<0.000000e+00> : vector<16xf32>
    %88 = vector.multi_reduction <add>, %87, %cst_29 [1] : vector<16x8xf32> to vector<16xf32>
    %89 = vector.shape_cast %88 : vector<16xf32> to vector<16x1xf32>
    %90 = arith.truncf %87 : vector<16x8xf32> to vector<16x8xbf16>
    %cst_30 = arith.constant dense<0.000000e+00> : vector<16x8xf32>
    %91 = tpu.matmul %90, %71, %cst_30 {dimension_numbers = #tpu.dot_dimension_numbers<[1], [0], [0], [1], [0, 0, 1, 1], [], []>} : vector<16x8xbf16>, vector<8x8xbf16>, vector<16x8xf32> -> vector<16x8xf32>
    %92 = tpu.reciprocal %89 {approx = true} : vector<16x1xf32> -> vector<16x1xf32>
    %93 = vector.broadcast %92 : vector<16x1xf32> to vector<16x8xf32>
    %94 = arith.mulf %91, %93 : vector<16x8xf32>
    %95 = vector.extract_strided_slice %94 {offsets = [0, 0], sizes = [8, 8], strides = [1, 1]} : vector<16x8xf32> to vector<8x8xf32>
    %96 = vector.extract_strided_slice %94 {offsets = [8, 0], sizes = [8, 8], strides = [1, 1]} : vector<16x8xf32> to vector<8x8xf32>
    %97 = tpu.concatenate %95, %96 in 1 : vector<8x8xf32>, vector<8x8xf32> -> vector<8x16xf32>
    %98 = vector.extract_strided_slice %64 {offsets = [0, 0], sizes = [16, 32], strides = [1, 1]} : vector<32x32xbf16> to vector<16x32xbf16>
    %99 = arith.truncf %97 : vector<8x16xf32> to vector<8x16xbf16>
    %cst_31 = arith.constant dense<0.000000e+00> : vector<8x32xf32>
    %100 = tpu.matmul %99, %98, %cst_31 {dimension_numbers = #tpu.dot_dimension_numbers<[1], [0], [0], [1], [0, 0, 1, 1], [], []>} : vector<8x16xbf16>, vector<16x32xbf16>, vector<8x32xf32> -> vector<8x32xf32>
    %101 = arith.addf %65, %100 : vector<8x32xf32>
    %102 = vector.extract_strided_slice %44 {offsets = [0, 4], sizes = [8, 4], strides = [1, 1]} : vector<8x16xf32> to vector<8x4xf32>
    %103 = vector.extract_strided_slice %44 {offsets = [0, 12], sizes = [8, 4], strides = [1, 1]} : vector<8x16xf32> to vector<8x4xf32>
    %104 = tpu.concatenate %102, %103 in 1 : vector<8x4xf32>, vector<8x4xf32> -> vector<8x8xf32>
    %105 = arith.truncf %104 : vector<8x8xf32> to vector<8x8xbf16>
    %106 = vector.extract_strided_slice %26 {offsets = [0, 8], sizes = [8, 8], strides = [1, 1]} : vector<8x16xf32> to vector<8x8xf32>
    %107 = arith.truncf %106 : vector<8x8xf32> to vector<8x8xbf16>
    %108 = vector.extract_strided_slice %36 {offsets = [0, 8], sizes = [8, 4], strides = [1, 1]} : vector<8x32xf32> to vector<8x4xf32>
    %109 = vector.extract_strided_slice %36 {offsets = [0, 24], sizes = [8, 4], strides = [1, 1]} : vector<8x32xf32> to vector<8x4xf32>
    %110 = tpu.concatenate %108, %109 in 1 : vector<8x4xf32>, vector<8x4xf32> -> vector<8x8xf32>
    %111 = vector.extract_strided_slice %36 {offsets = [0, 12], sizes = [8, 4], strides = [1, 1]} : vector<8x32xf32> to vector<8x4xf32>
    %112 = vector.extract_strided_slice %36 {offsets = [0, 28], sizes = [8, 4], strides = [1, 1]} : vector<8x32xf32> to vector<8x4xf32>
    %113 = tpu.concatenate %111, %112 in 1 : vector<8x4xf32>, vector<8x4xf32> -> vector<8x8xf32>
    %114 = tpu.concatenate %110, %113 in 0 : vector<8x8xf32>, vector<8x8xf32> -> vector<16x8xf32>
    %115 = arith.truncf %114 : vector<16x8xf32> to vector<16x8xbf16>
    %cst_32 = arith.constant dense<0.000000e+00> : vector<16x8xf32>
    %116 = tpu.matmul %115, %105, %cst_32 {dimension_numbers = #tpu.dot_dimension_numbers<[1], [1], [0], [0], [0, 0, 1, 0], [], []>} : vector<16x8xbf16>, vector<8x8xbf16>, vector<16x8xf32> -> vector<16x8xf32>
    %cst_33 = arith.constant -1.000000e+30 : f32
    %117 = vector.broadcast %cst_33 : f32 to vector<16x8xf32>
    %118 = arith.select %63, %116, %117 : vector<16x8xi1>, vector<16x8xf32>
    %cst_34 = arith.constant dense<0xFF800000> : vector<16xf32>
    %119 = vector.multi_reduction <maximumf>, %118, %cst_34 [1] : vector<16x8xf32> to vector<16xf32>
    %120 = vector.shape_cast %119 : vector<16xf32> to vector<16x1xf32>
    %121 = vector.broadcast %120 : vector<16x1xf32> to vector<16x8xf32>
    %122 = arith.subf %118, %121 : vector<16x8xf32>
    %123 = math.exp %122 : vector<16x8xf32>
    %cst_35 = arith.constant dense<0.000000e+00> : vector<16xf32>
    %124 = vector.multi_reduction <add>, %123, %cst_35 [1] : vector<16x8xf32> to vector<16xf32>
    %125 = vector.shape_cast %124 : vector<16xf32> to vector<16x1xf32>
    %126 = arith.truncf %123 : vector<16x8xf32> to vector<16x8xbf16>
    %cst_36 = arith.constant dense<0.000000e+00> : vector<16x8xf32>
    %127 = tpu.matmul %126, %107, %cst_36 {dimension_numbers = #tpu.dot_dimension_numbers<[1], [0], [0], [1], [0, 0, 1, 1], [], []>} : vector<16x8xbf16>, vector<8x8xbf16>, vector<16x8xf32> -> vector<16x8xf32>
    %128 = tpu.reciprocal %125 {approx = true} : vector<16x1xf32> -> vector<16x1xf32>
    %129 = vector.broadcast %128 : vector<16x1xf32> to vector<16x8xf32>
    %130 = arith.mulf %127, %129 : vector<16x8xf32>
    %131 = vector.extract_strided_slice %130 {offsets = [0, 0], sizes = [8, 8], strides = [1, 1]} : vector<16x8xf32> to vector<8x8xf32>
    %132 = vector.extract_strided_slice %130 {offsets = [8, 0], sizes = [8, 8], strides = [1, 1]} : vector<16x8xf32> to vector<8x8xf32>
    %133 = tpu.concatenate %131, %132 in 1 : vector<8x8xf32>, vector<8x8xf32> -> vector<8x16xf32>
    %134 = vector.extract_strided_slice %64 {offsets = [16, 0], sizes = [16, 32], strides = [1, 1]} : vector<32x32xbf16> to vector<16x32xbf16>
    %135 = arith.truncf %133 : vector<8x16xf32> to vector<8x16xbf16>
    %cst_37 = arith.constant dense<0.000000e+00> : vector<8x32xf32>
    %136 = tpu.matmul %135, %134, %cst_37 {dimension_numbers = #tpu.dot_dimension_numbers<[1], [0], [0], [1], [0, 0, 1, 1], [], []>} : vector<8x16xbf16>, vector<16x32xbf16>, vector<8x32xf32> -> vector<8x32xf32>
    %137 = arith.addf %101, %136 : vector<8x32xf32>
    %138 = arith.addf %2, %137 : vector<8x32xf32>
    %139 = arith.truncf %138 : vector<8x32xf32> to vector<8x32xbf16>
    %c0_38 = arith.constant 0 : index
    %c0_39 = arith.constant 0 : index
    %c0_40 = arith.constant 0 : index
    %140 = vector.load %arg10[%c0_38, %c0_39, %c0_40] : memref<1x8x32xbf16, #tpu.memory_space<vmem>>, vector<1x8x32xbf16>
    %141 = vector.shape_cast %140 : vector<1x8x32xbf16> to vector<8x32xbf16>
    %142 = vector.shape_cast %139 : vector<8x32xbf16> to vector<1x8x32xbf16>
    tpu.vector_store %arg10[%c0_38, %c0_39, %c0_40], %142 {strides = array<i32>} : memref<1x8x32xbf16, #tpu.memory_space<vmem>>, vector<1x8x32xbf16>,
    return
  }
  func.func @transform_0(%arg0: i32) -> (i32, i32, i32) {
    %c0_i32 = arith.constant 0 : i32
    %c0_i32_0 = arith.constant 0 : i32
    %c0_i32_1 = arith.constant 0 : i32
    return %arg0, %c0_i32, %c0_i32_0 : i32, i32, i32
  }
  func.func @transform_1(%arg0: i32) -> (i32, i32) {
    %c0_i32 = arith.constant 0 : i32
    %c0_i32_0 = arith.constant 0 : i32
    %c0_i32_1 = arith.constant 0 : i32
    return %c0_i32, %c0_i32_0 : i32, i32
  }
  func.func @transform_2(%arg0: i32) -> (i32, i32) {
    %c0_i32 = arith.constant 0 : i32
    %c0_i32_0 = arith.constant 0 : i32
    %c0_i32_1 = arith.constant 0 : i32
    return %c0_i32, %c0_i32_0 : i32, i32
  }
  func.func @transform_3(%arg0: i32) -> (i32, i32) {
    %c0_i32 = arith.constant 0 : i32
    %c0_i32_0 = arith.constant 0 : i32
    %c0_i32_1 = arith.constant 0 : i32
    return %c0_i32, %c0_i32_0 : i32, i32
  }
  func.func @transform_4(%arg0: i32) -> (i32, i32) {
    %c0_i32 = arith.constant 0 : i32
    %c0_i32_0 = arith.constant 0 : i32
    %c0_i32_1 = arith.constant 0 : i32
    return %c0_i32, %c0_i32_0 : i32, i32
  }
  func.func @transform_5(%arg0: i32) -> (i32, i32) {
    %c0_i32 = arith.constant 0 : i32
    %c0_i32_0 = arith.constant 0 : i32
    %c0_i32_1 = arith.constant 0 : i32
    return %c0_i32, %c0_i32_0 : i32, i32
  }
  func.func @transform_6(%arg0: i32) -> (i32, i32) {
    %c0_i32 = arith.constant 0 : i32
    %c0_i32_0 = arith.constant 0 : i32
    %c0_i32_1 = arith.constant 0 : i32
    return %c0_i32, %c0_i32_0 : i32, i32
  }
  func.func @transform_7(%arg0: i32) -> (i32, i32) {
    %c0_i32 = arith.constant 0 : i32
    %c0_i32_0 = arith.constant 0 : i32
    %c0_i32_1 = arith.constant 0 : i32
    return %c0_i32, %c0_i32_0 : i32, i32
  }
  func.func @transform_8(%arg0: i32) -> (i32, i32) {
    %c0_i32 = arith.constant 0 : i32
    %c0_i32_0 = arith.constant 0 : i32
    %c0_i32_1 = arith.constant 0 : i32
    return %c0_i32, %c0_i32_0 : i32, i32
  }
  func.func @transform_9(%arg0: i32) -> (i32, i32, i32) {
    %c0_i32 = arith.constant 0 : i32
    %c0_i32_0 = arith.constant 0 : i32
    %c0_i32_1 = arith.constant 0 : i32
    return %arg0, %c0_i32, %c0_i32_0 : i32, i32, i32
  }
}

</mosaic_0001>

<llo_original>
// kernel: chatglm_decoder_layer.3
$region0: #{chatglm_decoder_layer.3}
  #allocation0 [shape = 'u32[]', space=smem, size = 0x4, offset = 0x4, fixed_abs, tag = 'smem constant byte address 0x4 - core index']
  #allocation1 [shape = 'u32[72,128]{1,0:T(1,128)}', space=vmem, size = 0x9000, scoped, tag = 'internal scratch']
  #allocation2 [shape = 'f32[16,32]{1,0:T(8,128)}', space=vmem, size = 0x2000, scoped, tag = 'scratch operand']
  %s0 = inlined_call_operand.vmem [shape: bf16[16,32], index: 0, kind: input, shape index: {}, may-alias: {0,5}]
  %s1 = inlined_call_operand.vmem [shape: bf16[1,32], index: 1, kind: input, shape index: {}]
  %s2 = inlined_call_operand.vmem [shape: bf16[32,64], index: 2, kind: input, shape index: {}]
  %s3 = inlined_call_operand.vmem [shape: bf16[32,64], index: 3, kind: input, shape index: {}]
  %s4 = inlined_call_operand.vmem [shape: bf16[64,32], index: 4, kind: input, shape index: {}]
  %s5 = inlined_call_operand.vmem [shape: bf16[16,32], index: 5, kind: output, shape index: {}, may-alias: {0,5}]
  %s6 = sld [smem:[#allocation0]]
  $region38: #{chatglm_decoder_layer.3} parent=0
    _
  %s8 = ssub.s32 1, %s6
  %s9 = scalar_select 0, %s8, %s6
  // Predicated region
  $region2: #{chatglm_decoder_layer.3} parent=0 // pred_check
    _
  $region3: #{chatglm_decoder_layer.3} parent=0 // pred_check_branch
    %11 = sbr.rel (0) target = $region5
  $region4: #{chatglm_decoder_layer.3} parent=0 // pred_region
    _
  $region5: #{chatglm_decoder_layer.3} parent=0 // pred_fallthru
    _
  // Predicated region
  $region6: #{chatglm_decoder_layer.3} parent=0 // pred_check
    _
  $region7: #{chatglm_decoder_layer.3} parent=0 // pred_check_branch
    %13 = sbr.rel (0) target = $region9
  $region8: #{chatglm_decoder_layer.3} parent=0 // pred_region
    _
  $region9: #{chatglm_decoder_layer.3} parent=0 // pred_fallthru
    _
  // Predicated region
  $region10: #{chatglm_decoder_layer.3} parent=0 // pred_check
    _
  $region11: #{chatglm_decoder_layer.3} parent=0 // pred_check_branch
    %15 = sbr.rel (0) target = $region13
  $region12: #{chatglm_decoder_layer.3} parent=0 // pred_region
    _
  $region13: #{chatglm_decoder_layer.3} parent=0 // pred_fallthru
    _
  // Predicated region
  $region14: #{chatglm_decoder_layer.3} parent=0 // pred_check
    _
  $region15: #{chatglm_decoder_layer.3} parent=0 // pred_check_branch
    %17 = sbr.rel (0) target = $region17
  $region16: #{chatglm_decoder_layer.3} parent=0 // pred_region
    _
  $region17: #{chatglm_decoder_layer.3} parent=0 // pred_fallthru
    _
  // Predicated region
  $region18: #{chatglm_decoder_layer.3} parent=0 // pred_check
    _
  $region19: #{chatglm_decoder_layer.3} parent=0 // pred_check_branch
    %19 = sbr.rel (0) target = $region21
  $region20: #{chatglm_decoder_layer.3} parent=0 // pred_region
    _
  $region21: #{chatglm_decoder_layer.3} parent=0 // pred_fallthru
    _
  %v21 = vld [vmem:[%s0] sm:$0xf]
  %v22 = vld [vmem:[%s0 + $0x4] sm:$0xf]
  %v23 = vunpack.c.l.bf16 %v21
  %v24 = vunpack.c.l.bf16 %v22
  %p25 = scmp.eq.s32.totalorder 0, 0
  // Predicated region
  $region22: #{chatglm_decoder_layer.3} parent=0 // pred_check
    %p26 = pneg %p25
  $region23: #{chatglm_decoder_layer.3} parent=0 // pred_check_branch
    %28 = sbr.rel (%p26) target = $region25
  $region24: #{chatglm_decoder_layer.3} parent=0 // pred_region
    %vm29 = vcmask 261120
    %30 = vst.msk [vmem:[#allocation2] sm:$0xff] %vm29, %v23
    %31 = vst.msk [vmem:[#allocation2 + $0x8] sm:$0xff] %vm29, %v24
  $region25: #{chatglm_decoder_layer.3} parent=0 // pred_fallthru
    _
  %v32 = vmul.f32 %v23, %v23
  %v33 = vmul.f32 %v24, %v24
  %vm34 = vcmask 261120
  %v35 = vsel %vm34, %v32, 0.0
  %36 = vadd.xlane.f32.xlu0 %v35
  %v37 = vpop.xlane.xlu0 %36
  %v38 = vsel %vm34, %v33, 0.0
  %39 = vadd.xlane.f32.xlu0 %v38
  %v40 = vpop.xlane.xlu0 %39
  %v41 = vrcp.pop 32.0
  %v42 = vmul.f32 32.0, %v41
  %v43 = vsub.f32 1.0, %v42
  %v44 = vmul.f32 %v41, %v43
  %v45 = vadd.f32 %v41, %v44
  %vm46 = vweird.f32 %v41
  %v47 = vsel %vm46, %v41, %v45
  %v48 = vmul.f32 %v37, %v47
  %v49 = vmul.f32 %v40, %v47
  %v50 = vadd.f32 %v48, 1e-05
  %v51 = vadd.f32 %v49, 1e-05
  %v52 = vrsqrt.pop %v50
  %v53 = vmul.f32 %v52, %v50
  %v54 = vmul.f32 %v53, %v52
  %v55 = vmul.f32 0.5, %v54
  %v56 = vsub.f32 1.5, %v55
  %v57 = vmul.f32 %v52, %v56
  %vm58 = vweird.f32 %v50
  %vm59 = vweird.f32 %v52
  %vm60 = vmor %vm58, %vm59
  %v61 = vsel %vm60, %v52, %v57
  %v62 = vrsqrt.pop %v51
  %v63 = vmul.f32 %v62, %v51
  %v64 = vmul.f32 %v63, %v62
  %v65 = vmul.f32 0.5, %v64
  %v66 = vsub.f32 1.5, %v65
  %v67 = vmul.f32 %v62, %v66
  %vm68 = vweird.f32 %v51
  %vm69 = vweird.f32 %v62
  %vm70 = vmor %vm68, %vm69
  %v71 = vsel %vm70, %v62, %v67
  %v72 = vmul.f32 %v23, %v61
  %v73 = vmul.f32 %v24, %v71
  %v74 = vld [vmem:[%s1] sm:$0x1]
  %v75 = vunpack.c.l.bf16 %v74
  %v76 = vperm.slane %v75, 0
  %v77 = vmul.f32 %v72, %v76
  %v78 = vmul.f32 %v73, %v76
  %v79 = vpack.c.bf16 %v78, %v77
  %v80 = vld [vmem:[%s2] sm:$0xf]
  %v81 = vld [vmem:[%s2 + $0x4] sm:$0xf]
  %v82 = vld [vmem:[%s2 + $0x8] sm:$0xf]
  %v83 = vld [vmem:[%s2 + $0xc] sm:$0xf]
  %v88 = vunpack.c.l.b16 %v80
  %v89 = vunpack.c.l.b16 %v81
  %v90 = vunpack.c.l.b16 %v82
  %v91 = vunpack.c.l.b16 %v83
  %v92 = vpack.c.b16 %v89, %v88
  %v93 = vpack.c.b16 %v91, %v90
  %v97 = vsel %vm34, %v79, 0
  %99 = vmatpush.bf16.msra.mxu0 0
  %100 = vmatpush.bf16.msra.mxu0 0
  %101 = vmatpush.bf16.msra.mxu0 0
  %102 = vmatpush.bf16.msra.mxu0 0
  %103 = vmatpush.bf16.msra.mxu0 0
  %104 = vmatpush.bf16.msra.mxu0 0
  %105 = vmatpush.bf16.msra.mxu0 %v93
  %106 = vmatpush.bf16.msra.mxu0 %v92
  %107 = vmatmul.bf16.gmra.mxu0 %v97
  %v108 = vpop.f32.mrf.mxu0
  %v109 = vadd.f32 0.0, %v108
  %v110 = vpop.f32.mrf.mxu0
  %v111 = vadd.f32 0.0, %v110
  %112 = vdwg.mxu0
  %v113 = vld [vmem:[%s3] sm:$0xf]
  %v114 = vld [vmem:[%s3 + $0x4] sm:$0xf]
  %v115 = vld [vmem:[%s3 + $0x8] sm:$0xf]
  %v116 = vld [vmem:[%s3 + $0xc] sm:$0xf]
  %v121 = vunpack.c.l.b16 %v113
  %v122 = vunpack.c.l.b16 %v114
  %v123 = vunpack.c.l.b16 %v115
  %v124 = vunpack.c.l.b16 %v116
  %v125 = vpack.c.b16 %v122, %v121
  %v126 = vpack.c.b16 %v124, %v123
  %129 = vmatpush.bf16.msra.mxu0 0
  %130 = vmatpush.bf16.msra.mxu0 0
  %131 = vmatpush.bf16.msra.mxu0 0
  %132 = vmatpush.bf16.msra.mxu0 0
  %133 = vmatpush.bf16.msra.mxu0 0
  %134 = vmatpush.bf16.msra.mxu0 0
  %135 = vmatpush.bf16.msra.mxu0 %v126
  %136 = vmatpush.bf16.msra.mxu0 %v125
  %137 = vmatmul.bf16.gmra.mxu0 %v97
  %v138 = vpop.f32.mrf.mxu0
  %v139 = vadd.f32 0.0, %v138
  %v140 = vpop.f32.mrf.mxu0
  %v141 = vadd.f32 0.0, %v140
  %142 = vdwg.mxu0
  %v143 = vxor.u32 %v139, 2147483648
  %v144 = vxor.u32 %v141, 2147483648
  %v145 = vmul.f32 %v143, 1.442695
  %v146 = vpow.pop %v145
  %v147 = vmul.f32 %v144, 1.442695
  %v148 = vpow.pop %v147
  %v149 = vadd.f32 %v146, 1.0
  %v150 = vadd.f32 %v148, 1.0
  %v151 = vrcp.pop %v149
  %v152 = vmul.f32 %v149, %v151
  %v153 = vsub.f32 1.0, %v152
  %v154 = vmul.f32 %v151, %v153
  %v155 = vadd.f32 %v151, %v154
  %vm156 = vweird.f32 %v149
  %vm157 = vweird.f32 %v151
  %vm158 = vmor %vm156, %vm157
  %v159 = vsel %vm158, %v151, %v155
  %v160 = vand.u32 2147483647, %v149
  %vm161 = vcmp.eq.f32.partialorder %v160, 8.507059e+37
  %v162 = vand.u32 %v149, 2147483648
  %v163 = vor.u32 1.1754944e-38, %v162
  %v164 = vsel %vm161, %v163, %v159
  %v165 = vmul.f32 1.0, %v164
  %v166 = vrcp.pop %v150
  %v167 = vmul.f32 %v150, %v166
  %v168 = vsub.f32 1.0, %v167
  %v169 = vmul.f32 %v166, %v168
  %v170 = vadd.f32 %v166, %v169
  %vm171 = vweird.f32 %v150
  %vm172 = vweird.f32 %v166
  %vm173 = vmor %vm171, %vm172
  %v174 = vsel %vm173, %v166, %v170
  %v175 = vand.u32 2147483647, %v150
  %vm176 = vcmp.eq.f32.partialorder %v175, 8.507059e+37
  %v177 = vand.u32 %v150, 2147483648
  %v178 = vor.u32 1.1754944e-38, %v177
  %v179 = vsel %vm176, %v178, %v174
  %v180 = vmul.f32 1.0, %v179
  %v181 = vmul.f32 %v139, %v165
  %v182 = vmul.f32 %v141, %v180
  %v183 = vmul.f32 %v109, %v181
  %v184 = vmul.f32 %v111, %v182
  %v185 = vpack.c.bf16 %v184, %v183
  %v186 = vld [vmem:[#allocation2] sm:$0xff]
  %v187 = vld [vmem:[#allocation2 + $0x8] sm:$0xff]
  %v188 = vld [vmem:[%s4] sm:$0xf]
  %v189 = vld [vmem:[%s4 + $0x4] sm:$0xf]
  %v190 = vld [vmem:[%s4 + $0x8] sm:$0xf]
  %v191 = vld [vmem:[%s4 + $0xc] sm:$0xf]
  %v192 = vld [vmem:[%s4 + $0x10] sm:$0xf]
  %v193 = vld [vmem:[%s4 + $0x14] sm:$0xf]
  %v194 = vld [vmem:[%s4 + $0x18] sm:$0xf]
  %v195 = vld [vmem:[%s4 + $0x1c] sm:$0xf]
  %v204 = vunpack.c.l.b16 %v188
  %v205 = vunpack.c.l.b16 %v189
  %v206 = vunpack.c.l.b16 %v190
  %v207 = vunpack.c.l.b16 %v191
  %v208 = vunpack.c.l.b16 %v192
  %v209 = vunpack.c.l.b16 %v193
  %v210 = vunpack.c.l.b16 %v194
  %v211 = vunpack.c.l.b16 %v195
  %v212 = vpack.c.b16 %v205, %v204
  %v213 = vpack.c.b16 %v207, %v206
  %v214 = vpack.c.b16 %v209, %v208
  %v215 = vpack.c.b16 %v211, %v210
  %vm220 = vcmask 523264
  %v222 = vsel %vm220, %v185, 0
  %224 = vmatpush.bf16.msra.mxu0 0
  %225 = vmatpush.bf16.msra.mxu0 0
  %226 = vmatpush.bf16.msra.mxu0 0
  %227 = vmatpush.bf16.msra.mxu0 0
  %228 = vmatpush.bf16.msra.mxu0 %v215
  %229 = vmatpush.bf16.msra.mxu0 %v214
  %230 = vmatpush.bf16.msra.mxu0 %v213
  %231 = vmatpush.bf16.msra.mxu0 %v212
  %232 = vmatmul.bf16.gmra.mxu0 %v222
  %v233 = vpop.f32.mrf.mxu0
  %v234 = vadd.f32 0.0, %v233
  %v235 = vpop.f32.mrf.mxu0
  %v236 = vadd.f32 0.0, %v235
  %237 = vdwg.mxu0
  %v238 = vadd.f32 %v186, %v234
  %v239 = vadd.f32 %v187, %v236
  %240 = vst.msk [vmem:[#allocation2] sm:$0xff] %vm34, %v238
  %241 = vst.msk [vmem:[#allocation2 + $0x8] sm:$0xff] %vm34, %v239
  // Predicated region
  $region26: #{chatglm_decoder_layer.3} parent=0 // pred_check
    %p242 = pneg %p25
  $region27: #{chatglm_decoder_layer.3} parent=0 // pred_check_branch
    %244 = sbr.rel (%p242) target = $region29
  $region28: #{chatglm_decoder_layer.3} parent=0 // pred_region
    %v245 = vld [vmem:[#allocation2] sm:$0xff]
    %v246 = vld [vmem:[#allocation2 + $0x8] sm:$0xff]
    %v247 = vpack.c.bf16 %v245, %v245
    %v248 = vpack.c.bf16 %v246, %v246
    %vm249 = vcmask 257024
    %250 = vst.msk [vmem:[%s5] sm:$0xf] %vm249, %v247
    %251 = vst.msk [vmem:[%s5 + $0x4] sm:$0xf] %vm249, %v248
  $region29: #{chatglm_decoder_layer.3} parent=0 // pred_fallthru
    _
  // Predicated region
  $region30: #{chatglm_decoder_layer.3} parent=0 // pred_check
    _
  $region31: #{chatglm_decoder_layer.3} parent=0 // pred_check_branch
    %253 = sbr.rel (0) target = $region33
  $region32: #{chatglm_decoder_layer.3} parent=0 // pred_region
    _
  $region33: #{chatglm_decoder_layer.3} parent=0 // pred_fallthru
    _
  // Predicated region
  $region34: #{chatglm_decoder_layer.3} parent=0 // pred_check
    _
  $region35: #{chatglm_decoder_layer.3} parent=0 // pred_check_branch
    %255 = sbr.rel (0) target = $region37
  $region36: #{chatglm_decoder_layer.3} parent=0 // pred_region
    _
  $region37: #{chatglm_decoder_layer.3} parent=0 // pred_fallthru
    _

// kernel: chatglm_decoder_layer.2
$region0: #{chatglm_decoder_layer.2}
  #allocation0 [shape = 'u32[]', space=smem, size = 0x4, offset = 0x4, fixed_abs, tag = 'smem constant byte address 0x4 - core index']
  #allocation1 [shape = 'u32[72,128]{1,0:T(1,128)}', space=vmem, size = 0x9000, scoped, tag = 'internal scratch']
  %s0 = inlined_call_operand.vmem [shape: bf16[2,8,32], index: 0, kind: input, shape index: {}]
  %s1 = inlined_call_operand.vmem [shape: bf16[1,32], index: 1, kind: input, shape index: {}]
  %s2 = inlined_call_operand.vmem [shape: bf16[32,64], index: 2, kind: input, shape index: {}]
  %s3 = inlined_call_operand.vmem [shape: bf16[1,64], index: 3, kind: input, shape index: {}]
  %s4 = inlined_call_operand.vmem [shape: f32[8,32], index: 4, kind: input, shape index: {}]
  %s5 = inlined_call_operand.vmem [shape: f32[8,32], index: 5, kind: input, shape index: {}]
  %s6 = inlined_call_operand.vmem [shape: f32[8,16], index: 6, kind: input, shape index: {}]
  %s7 = inlined_call_operand.vmem [shape: f32[8,16], index: 7, kind: input, shape index: {}]
  %s8 = inlined_call_operand.vmem [shape: bf16[32,32], index: 8, kind: input, shape index: {}]
  %s9 = inlined_call_operand.vmem [shape: bf16[2,8,32], index: 9, kind: output, shape index: {}]
  %s10 = sld [smem:[#allocation0]]
  $region69: #{chatglm_decoder_layer.2} parent=0
    _
  %s12 = ssub.s32 1, %s10
  %s13 = scalar_select 0, %s12, %s10
  loop: start=0, step=1, limit=4
  $region2: #{chatglm_decoder_layer.2} parent=0 // loop_pre_header
    _
  $region3: #{chatglm_decoder_layer.2} parent=0 // loop_header
    %s15 = sphi 0, %s19
    %p16 = scmp.ge.s32.totalorder %s15, 4
    %s25 = sphi 0, %s27
    %s28 = sphi 0, %s25
    %s29 = sphi 0, %s28
    %s45 = sphi 0, %s29
    %s49 = sphi 0, %s49
    %s51 = sphi 0, %s49
    %s52 = sphi 0, %s51
    %s66 = sphi 0, %s52
    %s70 = sphi 0, %s70
    %s72 = sphi 0, %s70
    %s73 = sphi 0, %s72
    %s87 = sphi 0, %s73
    %s91 = sphi 0, %s91
    %s93 = sphi 0, %s91
    %s94 = sphi 0, %s93
    %s108 = sphi 0, %s94
    %s112 = sphi 0, %s112
    %s114 = sphi 0, %s112
    %s115 = sphi 0, %s114
    %s129 = sphi 0, %s115
    %s133 = sphi 0, %s133
    %s135 = sphi 0, %s133
    %s136 = sphi 0, %s135
    %s150 = sphi 0, %s136
    %s154 = sphi 0, %s154
    %s156 = sphi 0, %s154
    %s157 = sphi 0, %s156
    %s171 = sphi 0, %s157
    %s175 = sphi 0, %s175
    %s177 = sphi 0, %s175
    %s178 = sphi 0, %s177
    %s192 = sphi 0, %s178
    %s196 = sphi 0, %s196
    %s198 = sphi 0, %s196
    %s199 = sphi 0, %s198
    %s213 = sphi 0, %s199
    %s219 = sphi 0, %s221
    %s222 = sphi 0, %s219
    %s223 = sphi 0, %s222
    %s239 = sphi 0, %s223
  $region4: #{chatglm_decoder_layer.2} parent=0 // loop_header_branch
    %18 = sbr.rel (%p16) target = $region8
  $region5: #{chatglm_decoder_layer.2} parent=0 // loop_body
    %s20 = ssub.s32 %s15, 1
    %s21 = ssub.s32 %s15, 2
    %s22 = sadd.s32 %s15, 1
    %s23 = ssub.s32 %s15, %s22
    %p24 = scmp.eq.s32.totalorder %s23, 0
    %s26 = sadd.s32 %s25, 1
    %s27 = scalar_select %p24, %s25, %s26
    %p30 = pneg %p24
    %p31 = scmp.eq.s32.totalorder %s15, 1
    %p32 = por %p30, %p31
    %p33 = scmp.ne.s32.totalorder %s25, %s28
    %p34 = scmp.eq.s32.totalorder %s15, 0
    %p35 = por %p33, %p34
    %p36 = scmp.ne.s32.totalorder %s25, %s28
    %p37 = scmp.eq.s32.totalorder %s20, 1
    %p38 = por %p36, %p37
    %p39 = scmp.ne.s32.totalorder %s28, %s29
    %p40 = scmp.eq.s32.totalorder %s20, 0
    %p41 = por %p39, %p40
    %p42 = scmp.ne.s32.totalorder %s28, %s29
    %p43 = scmp.eq.s32.totalorder %s21, 1
    %p44 = por %p42, %p43
    %p46 = scmp.ne.s32.totalorder %s29, %s45
    %p47 = scmp.eq.s32.totalorder %s21, 0
    %p48 = por %p46, %p47
    %s50 = sadd.s32 %s49, 1
    %p53 = scmp.eq.s32.totalorder %s15, 1
    %p54 = scmp.ne.s32.totalorder %s49, %s51
    %p55 = scmp.eq.s32.totalorder %s15, 0
    %p56 = por %p54, %p55
    %p57 = scmp.ne.s32.totalorder %s49, %s51
    %p58 = scmp.eq.s32.totalorder %s20, 1
    %p59 = por %p57, %p58
    %p60 = scmp.ne.s32.totalorder %s51, %s52
    %p61 = scmp.eq.s32.totalorder %s20, 0
    %p62 = por %p60, %p61
    %p63 = scmp.ne.s32.totalorder %s51, %s52
    %p64 = scmp.eq.s32.totalorder %s21, 1
    %p65 = por %p63, %p64
    %p67 = scmp.ne.s32.totalorder %s52, %s66
    %p68 = scmp.eq.s32.totalorder %s21, 0
    %p69 = por %p67, %p68
    %s71 = sadd.s32 %s70, 1
    %p74 = scmp.eq.s32.totalorder %s15, 1
    %p75 = scmp.ne.s32.totalorder %s70, %s72
    %p76 = scmp.eq.s32.totalorder %s15, 0
    %p77 = por %p75, %p76
    %p78 = scmp.ne.s32.totalorder %s70, %s72
    %p79 = scmp.eq.s32.totalorder %s20, 1
    %p80 = por %p78, %p79
    %p81 = scmp.ne.s32.totalorder %s72, %s73
    %p82 = scmp.eq.s32.totalorder %s20, 0
    %p83 = por %p81, %p82
    %p84 = scmp.ne.s32.totalorder %s72, %s73
    %p85 = scmp.eq.s32.totalorder %s21, 1
    %p86 = por %p84, %p85
    %p88 = scmp.ne.s32.totalorder %s73, %s87
    %p89 = scmp.eq.s32.totalorder %s21, 0
    %p90 = por %p88, %p89
    %s92 = sadd.s32 %s91, 1
    %p95 = scmp.eq.s32.totalorder %s15, 1
    %p96 = scmp.ne.s32.totalorder %s91, %s93
    %p97 = scmp.eq.s32.totalorder %s15, 0
    %p98 = por %p96, %p97
    %p99 = scmp.ne.s32.totalorder %s91, %s93
    %p100 = scmp.eq.s32.totalorder %s20, 1
    %p101 = por %p99, %p100
    %p102 = scmp.ne.s32.totalorder %s93, %s94
    %p103 = scmp.eq.s32.totalorder %s20, 0
    %p104 = por %p102, %p103
    %p105 = scmp.ne.s32.totalorder %s93, %s94
    %p106 = scmp.eq.s32.totalorder %s21, 1
    %p107 = por %p105, %p106
    %p109 = scmp.ne.s32.totalorder %s94, %s108
    %p110 = scmp.eq.s32.totalorder %s21, 0
    %p111 = por %p109, %p110
    %s113 = sadd.s32 %s112, 1
    %p116 = scmp.eq.s32.totalorder %s15, 1
    %p117 = scmp.ne.s32.totalorder %s112, %s114
    %p118 = scmp.eq.s32.totalorder %s15, 0
    %p119 = por %p117, %p118
    %p120 = scmp.ne.s32.totalorder %s112, %s114
    %p121 = scmp.eq.s32.totalorder %s20, 1
    %p122 = por %p120, %p121
    %p123 = scmp.ne.s32.totalorder %s114, %s115
    %p124 = scmp.eq.s32.totalorder %s20, 0
    %p125 = por %p123, %p124
    %p126 = scmp.ne.s32.totalorder %s114, %s115
    %p127 = scmp.eq.s32.totalorder %s21, 1
    %p128 = por %p126, %p127
    %p130 = scmp.ne.s32.totalorder %s115, %s129
    %p131 = scmp.eq.s32.totalorder %s21, 0
    %p132 = por %p130, %p131
    %s134 = sadd.s32 %s133, 1
    %p137 = scmp.eq.s32.totalorder %s15, 1
    %p138 = scmp.ne.s32.totalorder %s133, %s135
    %p139 = scmp.eq.s32.totalorder %s15, 0
    %p140 = por %p138, %p139
    %p141 = scmp.ne.s32.totalorder %s133, %s135
    %p142 = scmp.eq.s32.totalorder %s20, 1
    %p143 = por %p141, %p142
    %p144 = scmp.ne.s32.totalorder %s135, %s136
    %p145 = scmp.eq.s32.totalorder %s20, 0
    %p146 = por %p144, %p145
    %p147 = scmp.ne.s32.totalorder %s135, %s136
    %p148 = scmp.eq.s32.totalorder %s21, 1
    %p149 = por %p147, %p148
    %p151 = scmp.ne.s32.totalorder %s136, %s150
    %p152 = scmp.eq.s32.totalorder %s21, 0
    %p153 = por %p151, %p152
    %s155 = sadd.s32 %s154, 1
    %p158 = scmp.eq.s32.totalorder %s15, 1
    %p159 = scmp.ne.s32.totalorder %s154, %s156
    %p160 = scmp.eq.s32.totalorder %s15, 0
    %p161 = por %p159, %p160
    %p162 = scmp.ne.s32.totalorder %s154, %s156
    %p163 = scmp.eq.s32.totalorder %s20, 1
    %p164 = por %p162, %p163
    %p165 = scmp.ne.s32.totalorder %s156, %s157
    %p166 = scmp.eq.s32.totalorder %s20, 0
    %p167 = por %p165, %p166
    %p168 = scmp.ne.s32.totalorder %s156, %s157
    %p169 = scmp.eq.s32.totalorder %s21, 1
    %p170 = por %p168, %p169
    %p172 = scmp.ne.s32.totalorder %s157, %s171
    %p173 = scmp.eq.s32.totalorder %s21, 0
    %p174 = por %p172, %p173
    %s176 = sadd.s32 %s175, 1
    %p179 = scmp.eq.s32.totalorder %s15, 1
    %p180 = scmp.ne.s32.totalorder %s175, %s177
    %p181 = scmp.eq.s32.totalorder %s15, 0
    %p182 = por %p180, %p181
    %p183 = scmp.ne.s32.totalorder %s175, %s177
    %p184 = scmp.eq.s32.totalorder %s20, 1
    %p185 = por %p183, %p184
    %p186 = scmp.ne.s32.totalorder %s177, %s178
    %p187 = scmp.eq.s32.totalorder %s20, 0
    %p188 = por %p186, %p187
    %p189 = scmp.ne.s32.totalorder %s177, %s178
    %p190 = scmp.eq.s32.totalorder %s21, 1
    %p191 = por %p189, %p190
    %p193 = scmp.ne.s32.totalorder %s178, %s192
    %p194 = scmp.eq.s32.totalorder %s21, 0
    %p195 = por %p193, %p194
    %s197 = sadd.s32 %s196, 1
    %p200 = scmp.eq.s32.totalorder %s15, 1
    %p201 = scmp.ne.s32.totalorder %s196, %s198
    %p202 = scmp.eq.s32.totalorder %s15, 0
    %p203 = por %p201, %p202
    %p204 = scmp.ne.s32.totalorder %s196, %s198
    %p205 = scmp.eq.s32.totalorder %s20, 1
    %p206 = por %p204, %p205
    %p207 = scmp.ne.s32.totalorder %s198, %s199
    %p208 = scmp.eq.s32.totalorder %s20, 0
    %p209 = por %p207, %p208
    %p210 = scmp.ne.s32.totalorder %s198, %s199
    %p211 = scmp.eq.s32.totalorder %s21, 1
    %p212 = por %p210, %p211
    %p214 = scmp.ne.s32.totalorder %s199, %s213
    %p215 = scmp.eq.s32.totalorder %s21, 0
    %p216 = por %p214, %p215
    %s217 = ssub.s32 %s15, %s22
    %p218 = scmp.eq.s32.totalorder %s217, 0
    %s220 = sadd.s32 %s219, 1
    %s221 = scalar_select %p218, %s219, %s220
    %p224 = pneg %p218
    %p225 = scmp.eq.s32.totalorder %s15, 1
    %p226 = por %p224, %p225
    %p227 = scmp.ne.s32.totalorder %s219, %s222
    %p228 = scmp.eq.s32.totalorder %s15, 0
    %p229 = por %p227, %p228
    %p230 = scmp.ne.s32.totalorder %s219, %s222
    %p231 = scmp.eq.s32.totalorder %s20, 1
    %p232 = por %p230, %p231
    %p233 = scmp.ne.s32.totalorder %s222, %s223
    %p234 = scmp.eq.s32.totalorder %s20, 0
    %p235 = por %p233, %p234
    %p236 = scmp.ne.s32.totalorder %s222, %s223
    %p237 = scmp.eq.s32.totalorder %s21, 1
    %p238 = por %p236, %p237
    %p240 = scmp.ne.s32.totalorder %s223, %s239
    %p241 = scmp.eq.s32.totalorder %s21, 0
    %p242 = por %p240, %p241
    %p243 = scmp.le.s32.totalorder 1, %s15
    %p244 = scmp.lt.s32.totalorder %s15, 3
    %p245 = pnand %p243, %p244
    %p246 = pneg %p245
    // Predicated region
    $region9: #{chatglm_decoder_layer.2} parent=5 // pred_check
      _
    $region10: #{chatglm_decoder_layer.2} parent=5 // pred_check_branch
      %248 = sbr.rel (%p245) target = $region12
    $region11: #{chatglm_decoder_layer.2} parent=5 // pred_region
      %s249 = ssub.s32 %s15, 1
      // Predicated region
      $region13: #{chatglm_decoder_layer.2} parent=11 // pred_check
        %p250 = pneg %p62
      $region14: #{chatglm_decoder_layer.2} parent=11 // pred_check_branch
        %252 = sbr.rel (%p250) target = $region16
      $region15: #{chatglm_decoder_layer.2} parent=11 // pred_region
        _
      $region16: #{chatglm_decoder_layer.2} parent=11 // pred_fallthru
        _
      // Predicated region
      $region17: #{chatglm_decoder_layer.2} parent=11 // pred_check
        %p253 = pneg %p83
      $region18: #{chatglm_decoder_layer.2} parent=11 // pred_check_branch
        %255 = sbr.rel (%p253) target = $region20
      $region19: #{chatglm_decoder_layer.2} parent=11 // pred_region
        _
      $region20: #{chatglm_decoder_layer.2} parent=11 // pred_fallthru
        _
      // Predicated region
      $region21: #{chatglm_decoder_layer.2} parent=11 // pred_check
        %p256 = pneg %p104
      $region22: #{chatglm_decoder_layer.2} parent=11 // pred_check_branch
        %258 = sbr.rel (%p256) target = $region24
      $region23: #{chatglm_decoder_layer.2} parent=11 // pred_region
        _
      $region24: #{chatglm_decoder_layer.2} parent=11 // pred_fallthru
        _
      // Predicated region
      $region25: #{chatglm_decoder_layer.2} parent=11 // pred_check
        %p259 = pneg %p125
      $region26: #{chatglm_decoder_layer.2} parent=11 // pred_check_branch
        %261 = sbr.rel (%p259) target = $region28
      $region27: #{chatglm_decoder_layer.2} parent=11 // pred_region
        _
      $region28: #{chatglm_decoder_layer.2} parent=11 // pred_fallthru
        _
      // Predicated region
      $region29: #{chatglm_decoder_layer.2} parent=11 // pred_check
        %p262 = pneg %p146
      $region30: #{chatglm_decoder_layer.2} parent=11 // pred_check_branch
        %264 = sbr.rel (%p262) target = $region32
      $region31: #{chatglm_decoder_layer.2} parent=11 // pred_region
        _
      $region32: #{chatglm_decoder_layer.2} parent=11 // pred_fallthru
        _
      // Predicated region
      $region33: #{chatglm_decoder_layer.2} parent=11 // pred_check
        %p265 = pneg %p167
      $region34: #{chatglm_decoder_layer.2} parent=11 // pred_check_branch
        %267 = sbr.rel (%p265) target = $region36
      $region35: #{chatglm_decoder_layer.2} parent=11 // pred_region
        _
      $region36: #{chatglm_decoder_layer.2} parent=11 // pred_fallthru
        _
      // Predicated region
      $region37: #{chatglm_decoder_layer.2} parent=11 // pred_check
        %p268 = pneg %p188
      $region38: #{chatglm_decoder_layer.2} parent=11 // pred_check_branch
        %270 = sbr.rel (%p268) target = $region40
      $region39: #{chatglm_decoder_layer.2} parent=11 // pred_region
        _
      $region40: #{chatglm_decoder_layer.2} parent=11 // pred_fallthru
        _
      // Predicated region
      $region41: #{chatglm_decoder_layer.2} parent=11 // pred_check
        %p271 = pneg %p209
      $region42: #{chatglm_decoder_layer.2} parent=11 // pred_check_branch
        %273 = sbr.rel (%p271) target = $region44
      $region43: #{chatglm_decoder_layer.2} parent=11 // pred_region
        _
      $region44: #{chatglm_decoder_layer.2} parent=11 // pred_fallthru
        _
    $region12: #{chatglm_decoder_layer.2} parent=5 // pred_fallthru
      _
    %p274 = scmp.lt.s32.totalorder %s15, 2
    // Predicated region
    $region45: #{chatglm_decoder_layer.2} parent=5 // pred_check
      %p275 = pneg %p274
    $region46: #{chatglm_decoder_layer.2} parent=5 // pred_check_branch
      %277 = sbr.rel (%p275) target = $region48
    $region47: #{chatglm_decoder_layer.2} parent=5 // pred_region
      // Predicated region
      $region49: #{chatglm_decoder_layer.2} parent=47 // pred_check
        %p278 = pneg %p35
      $region50: #{chatglm_decoder_layer.2} parent=47 // pred_check_branch
        %280 = sbr.rel (%p278) target = $region52
      $region51: #{chatglm_decoder_layer.2} parent=47 // pred_region
        %p281 = scmp.lt.s32.totalorder %s15, 1
        %s282 = scalar_select %p281, %s15, 1
        %s283 = smul.addr %s282, 4
        %s284 = scalar_lea.vmem %s0, %s283
      $region52: #{chatglm_decoder_layer.2} parent=47 // pred_fallthru
        _
    $region48: #{chatglm_decoder_layer.2} parent=5 // pred_fallthru
      _
    %p285 = scmp.le.s32.totalorder 1, %s15
    %p286 = scmp.lt.s32.totalorder %s15, 3
    %p287 = pnand %p285, %p286
    %p288 = pneg %p287
    // Predicated region
    $region53: #{chatglm_decoder_layer.2} parent=5 // pred_check
      _
    $region54: #{chatglm_decoder_layer.2} parent=5 // pred_check_branch
      %290 = sbr.rel (%p287) target = $region56
    $region55: #{chatglm_decoder_layer.2} parent=5 // pred_region
      %s291 = ssub.s32 %s15, 1
      %p292 = scmp.lt.s32.totalorder %s20, 1
      %s293 = scalar_select %p292, %s20, 1
      %s294 = smul.addr %s293, 4
      %s295 = scalar_lea.vmem %s0, %s294
      %p296 = pneg %p41
      %p297 = pneg %p38
      %p298 = pneg %p62
      %p299 = pneg %p59
      %p300 = pneg %p83
      %p301 = pneg %p80
      %p302 = pneg %p104
      %p303 = pneg %p101
      %p304 = pneg %p125
      %p305 = pneg %p122
      %p306 = pneg %p146
      %p307 = pneg %p143
      %p308 = pneg %p167
      %p309 = pneg %p164
      %p310 = pneg %p188
      %p311 = pneg %p185
      %p312 = pneg %p209
      %p313 = pneg %p206
      %p314 = pneg %p235
      %p315 = pneg %p232
      %p316 = scmp.lt.s32.totalorder %s20, 1
      %s317 = scalar_select %p316, %s20, 1
      %s318 = smul.addr %s317, 4
      %s319 = scalar_lea.vmem %s9, %s318
      %p320 = scmp.lt.s32.totalorder %s20, 1
      %s321 = scalar_select %p320, %s20, 1
      %s322 = smul.addr %s321, 4
      %s323 = scalar_lea.vmem %s0, %s322
      %p324 = scmp.lt.s32.totalorder %s20, 1
      %s325 = scalar_select %p324, %s20, 1
      %s326 = smul.addr %s325, 4
      %s327 = scalar_lea.vmem %s9, %s326
      %v329 = vld [vmem:[%s323] sm:$0xf]
      %v330 = vunpack.c.l.bf16 %v329
      %v331 = vmul.f32 %v330, %v330
      %vm332 = vcmask 261120
      %v333 = vsel %vm332, %v331, 0.0
      %334 = vadd.xlane.f32.xlu0 %v333
      %v335 = vpop.xlane.xlu0 %334
      %v336 = vrcp.pop 32.0
      %v337 = vmul.f32 32.0, %v336
      %v338 = vsub.f32 1.0, %v337
      %v339 = vmul.f32 %v336, %v338
      %v340 = vadd.f32 %v336, %v339
      %vm341 = vweird.f32 %v336
      %v342 = vsel %vm341, %v336, %v340
      %v343 = vmul.f32 %v335, %v342
      %v344 = vadd.f32 %v343, 1e-05
      %v345 = vrsqrt.pop %v344
      %v346 = vmul.f32 %v345, %v344
      %v347 = vmul.f32 %v346, %v345
      %v348 = vmul.f32 0.5, %v347
      %v349 = vsub.f32 1.5, %v348
      %v350 = vmul.f32 %v345, %v349
      %vm351 = vweird.f32 %v344
      %vm352 = vweird.f32 %v345
      %vm353 = vmor %vm351, %vm352
      %v354 = vsel %vm353, %v345, %v350
      %v355 = vmul.f32 %v330, %v354
      %v356 = vld [vmem:[%s1] sm:$0x1]
      %v357 = vunpack.c.l.bf16 %v356
      %v358 = vperm.slane %v357, 0
      %v359 = vmul.f32 %v355, %v358
      %v360 = vpack.c.bf16 %v359, %v359
      %v361 = vld [vmem:[%s2] sm:$0xf]
      %v362 = vld [vmem:[%s2 + $0x4] sm:$0xf]
      %v363 = vld [vmem:[%s2 + $0x8] sm:$0xf]
      %v364 = vld [vmem:[%s2 + $0xc] sm:$0xf]
      %v365 = vld [vmem:[%s3] sm:$0x1]
      %v366 = vunpack.c.l.bf16 %v365
      %v367 = vperm.slane %v366, 0
      %v372 = vunpack.c.l.b16 %v361
      %v373 = vunpack.c.l.b16 %v362
      %v374 = vunpack.c.l.b16 %v363
      %v375 = vunpack.c.l.b16 %v364
      %v376 = vpack.c.b16 %v373, %v372
      %v377 = vpack.c.b16 %v375, %v374
      %v381 = vsel %vm332, %v360, 0
      %383 = vmatpush.bf16.msra.mxu0 0
      %384 = vmatpush.bf16.msra.mxu0 0
      %385 = vmatpush.bf16.msra.mxu0 0
      %386 = vmatpush.bf16.msra.mxu0 0
      %387 = vmatpush.bf16.msra.mxu0 0
      %388 = vmatpush.bf16.msra.mxu0 0
      %389 = vmatpush.bf16.msra.mxu0 %v377
      %390 = vmatpush.bf16.msra.mxu0 %v376
      %391 = vmatmul.bf16.gmra.mxu0 %v381
      %v392 = vpop.f32.mrf.mxu0
      %v393 = vadd.f32 %v367, %v392
      %v394 = vpop.f32.mrf.mxu0
      %395 = vdwg.mxu0
      %v396 = vld [vmem:[%s4] sm:$0xff]
      %v397 = vld [vmem:[%s5] sm:$0xff]
      %399 = vrot.lane.b32.xlu0 %v393, 112
      %v400 = vpop.permute.xlu0 %399
      %402 = vrot.lane.b32.xlu0 %v393, 16
      %v403 = vpop.permute.xlu0 %402
      %vm405 = vcmask 130048
      %v406 = vsel %vm405, %v400, %v403
      %v407 = vmul.f32 %v393, %v396
      %v408 = vmul.f32 %v406, %v397
      %v409 = vadd.f32 %v407, %v408
      %v410 = vmul.f32 %v409, 0.35355338
      %v411 = vld [vmem:[%s6] sm:$0xff]
      %v412 = vld [vmem:[%s7] sm:$0xff]
      %413 = vrot.lane.b32.xlu0 %v393, 88
      %v414 = vpop.permute.xlu0 %413
      %416 = vrot.lane.b32.xlu0 %v393, 104
      %v417 = vpop.permute.xlu0 %416
      %vm419 = vcmask 64512
      %v420 = vsel %vm419, %v414, %v417
      %422 = vrot.lane.b32.xlu0 %v411, 32
      %v423 = vpop.permute.xlu0 %422
      %v425 = vmul.f32 %v393, %v423
      %v426 = vmul.f32 %v420, %v412
      %428 = vrot.lane.b32.xlu0 %v426, 32
      %v429 = vpop.permute.xlu0 %428
      %v431 = vadd.f32 %v425, %v429
      %v432 = vlaneseq
      %v433 = vshrl.u32 %v432, 7
      %v434 = vadd.s32 %v433, 8
      %vm435 = vcmp.lt.s32.totalorder %v433, 0
      %v436 = vsub.s32 0, %v433
      %v437 = vsel %vm435, %v436, %v433
      %v438 = vshrl.u32 %v437, 3
      %v439 = vand.u32 %v437, 7
      %v440 = vsub.s32 0, %v439
      %v441 = vsel %vm435, %v440, %v439
      %vm442 = vcmp.lt.s32.totalorder %v434, 0
      %v443 = vsub.s32 0, %v434
      %v444 = vsel %vm442, %v443, %v434
      %v445 = vshrl.u32 %v444, 3
      %v446 = vand.u32 %v444, 7
      %v447 = vsub.s32 0, %v446
      %v448 = vsel %vm442, %v447, %v446
      %vm449 = vcmp.ne.s32.totalorder %v441, 0
      %vm450 = vcmp.ne.s32.totalorder %v448, 0
      %vm451 = vcmp.lt.s32.totalorder %v441, 0
      %vm452 = vcmp.lt.s32.totalorder %v448, 0
      %vm453 = vmand %vm451, %vm449
      %vm454 = vmand %vm452, %vm450
      %v455 = vadd.s32 %v441, 8
      %v456 = vadd.s32 %v448, 8
      %v457 = vsel %vm453, %v455, %v441
      %v458 = vsel %vm454, %v456, %v448
      %v459 = vlaneseq
      %v460 = vand.u32 %v459, 127
      %vm461 = vcmp.le.s32.totalorder %v460, %v457
      %vm462 = vcmp.le.s32.totalorder %v460, %v458
      %v463 = vld [vmem:[%s8] sm:$0xf]
      %v464 = vld [vmem:[%s8 + $0x4] sm:$0xf]
      %v465 = vld [vmem:[%s8 + $0x8] sm:$0xf]
      %v466 = vld [vmem:[%s8 + $0xc] sm:$0xf]
      %468 = vrot.lane.b32.xlu0 %v431, 96
      %v469 = vpop.permute.xlu0 %468
      %471 = vrot.lane.b32.xlu0 %v431, 92
      %v472 = vpop.permute.xlu0 %471
      %vm474 = vcmask 31744
      %v475 = vsel %vm474, %v469, %v472
      %v476 = vpack.c.bf16 %v475, %v475
      %v477 = vpack.c.bf16 %v393, %v393
      %479 = vrot.lane.b32.xlu0 %v410, 116
      %v480 = vpop.permute.xlu0 %479
      %v482 = vsel %vm474, %v410, %v480
      %483 = vrot.lane.b32.xlu0 %v410, 124
      %v484 = vpop.permute.xlu0 %483
      %486 = vrot.lane.b32.xlu0 %v410, 112
      %v487 = vpop.permute.xlu0 %486
      %v489 = vsel %vm474, %v484, %v487
      %v490 = vpack.c.bf16 %v489, %v482
      %v492 = vsel %vm419, %v490, 0
      %v495 = vsel %vm419, %v476, 0
      %497 = vmatpush.bf16.xpose.msra.mxu0 0
      %498 = vmatpush.bf16.xpose.msra.mxu0 0
      %499 = vmatpush.bf16.xpose.msra.mxu0 0
      %500 = vmatpush.bf16.xpose.msra.mxu0 0
      %501 = vmatpush.bf16.xpose.msra.mxu0 0
      %502 = vmatpush.bf16.xpose.msra.mxu0 0
      %503 = vmatpush.bf16.xpose.msra.mxu0 0
      %504 = vmatpush.bf16.xpose.msra.mxu0 %v495
      %505 = vmatmul.bf16.gmra.mxu0 %v492
      %v506 = vpop.f32.mrf.mxu0
      %v507 = vadd.f32 0.0, %v506
      %v508 = vpop.f32.mrf.mxu0
      %v509 = vadd.f32 0.0, %v508
      %510 = vdwg.mxu0
      %v511 = vsel %vm461, %v507, -1e+30
      %v512 = vsel %vm462, %v509, -1e+30
      %v513 = vsel %vm419, %v511, -inf
      %514 = vmax.xlane.f32.xlu0 %v513
      %v515 = vpop.xlane.xlu0 %514
      %v516 = vsel %vm419, %v512, -inf
      %517 = vmax.xlane.f32.xlu0 %v516
      %v518 = vpop.xlane.xlu0 %517
      %v519 = vsub.f32 %v511, %v515
      %v520 = vsub.f32 %v512, %v518
      %v521 = vmul.f32 %v519, 1.442695
      %v522 = vpow.pop %v521
      %v523 = vmul.f32 %v520, 1.442695
      %v524 = vpow.pop %v523
      %v525 = vsel %vm419, %v522, 0.0
      %526 = vadd.xlane.f32.xlu0 %v525
      %v527 = vpop.xlane.xlu0 %526
      %v528 = vsel %vm419, %v524, 0.0
      %529 = vadd.xlane.f32.xlu0 %v528
      %v530 = vpop.xlane.xlu0 %529
      %v531 = vpack.c.bf16 %v524, %v522
      %533 = vrot.lane.b32.xlu0 %v477, 80
      %v534 = vpop.permute.xlu0 %533
      %v536 = vsel %vm419, %v531, 0
      %vm538 = vcmask 1043456
      %v540 = vsel %vm538, %v534, 0
      %542 = vmatpush.bf16.msra.mxu0 0
      %543 = vmatpush.bf16.msra.mxu0 0
      %544 = vmatpush.bf16.msra.mxu0 0
      %545 = vmatpush.bf16.msra.mxu0 0
      %546 = vmatpush.bf16.msra.mxu0 0
      %547 = vmatpush.bf16.msra.mxu0 0
      %548 = vmatpush.bf16.msra.mxu0 0
      %549 = vmatpush.bf16.msra.mxu0 %v540
      %550 = vmatmul.bf16.gmra.mxu0 %v536
      %v551 = vpop.f32.mrf.mxu0
      %v552 = vadd.f32 0.0, %v551
      %v553 = vpop.f32.mrf.mxu0
      %v554 = vadd.f32 0.0, %v553
      %555 = vdwg.mxu0
      %v556 = vrcp.pop %v527
      %v557 = vrcp.pop %v530
      %v558 = vmul.f32 %v552, %v556
      %v559 = vmul.f32 %v554, %v557
      %561 = vrot.lane.b32.xlu0 %v559, 8
      %v562 = vpop.permute.xlu0 %561
      %v564 = vsel %vm419, %v558, %v562
      %v565 = vpack.c.bf16 %v564, %v564
      %566 = vrot.lane.b32.xlu0 %v431, 88
      %v567 = vpop.permute.xlu0 %566
      %v569 = vsel %vm474, %v472, %v567
      %v570 = vpack.c.bf16 %v569, %v569
      %571 = vrot.lane.b32.xlu0 %v410, 120
      %v572 = vpop.permute.xlu0 %571
      %574 = vrot.lane.b32.xlu0 %v410, 108
      %v575 = vpop.permute.xlu0 %574
      %v577 = vsel %vm474, %v572, %v575
      %578 = vrot.lane.b32.xlu0 %v410, 104
      %v579 = vpop.permute.xlu0 %578
      %v581 = vsel %vm474, %v480, %v579
      %v582 = vpack.c.bf16 %v581, %v577
      %v584 = vsel %vm419, %v582, 0
      %v587 = vsel %vm419, %v570, 0
      %589 = vmatpush.bf16.xpose.msra.mxu0 0
      %590 = vmatpush.bf16.xpose.msra.mxu0 0
      %591 = vmatpush.bf16.xpose.msra.mxu0 0
      %592 = vmatpush.bf16.xpose.msra.mxu0 0
      %593 = vmatpush.bf16.xpose.msra.mxu0 0
      %594 = vmatpush.bf16.xpose.msra.mxu0 0
      %595 = vmatpush.bf16.xpose.msra.mxu0 0
      %596 = vmatpush.bf16.xpose.msra.mxu0 %v587
      %597 = vmatmul.bf16.gmra.mxu0 %v584
      %v598 = vpop.f32.mrf.mxu0
      %v599 = vadd.f32 0.0, %v598
      %v600 = vpop.f32.mrf.mxu0
      %v601 = vadd.f32 0.0, %v600
      %602 = vdwg.mxu0
      %v603 = vsel %vm461, %v599, -1e+30
      %v604 = vsel %vm462, %v601, -1e+30
      %v605 = vsel %vm419, %v603, -inf
      %606 = vmax.xlane.f32.xlu0 %v605
      %v607 = vpop.xlane.xlu0 %606
      %v608 = vsel %vm419, %v604, -inf
      %609 = vmax.xlane.f32.xlu0 %v608
      %v610 = vpop.xlane.xlu0 %609
      %v611 = vsub.f32 %v603, %v607
      %v612 = vsub.f32 %v604, %v610
      %v613 = vmul.f32 %v611, 1.442695
      %v614 = vpow.pop %v613
      %v615 = vmul.f32 %v612, 1.442695
      %v616 = vpow.pop %v615
      %v617 = vsel %vm419, %v614, 0.0
      %618 = vadd.xlane.f32.xlu0 %v617
      %v619 = vpop.xlane.xlu0 %618
      %v620 = vsel %vm419, %v616, 0.0
      %621 = vadd.xlane.f32.xlu0 %v620
      %v622 = vpop.xlane.xlu0 %621
      %v623 = vpack.c.bf16 %v616, %v614
      %624 = vrot.lane.b32.xlu0 %v477, 72
      %v625 = vpop.permute.xlu0 %624
      %v627 = vsel %vm419, %v623, 0
      %v630 = vsel %vm538, %v625, 0
      %632 = vmatpush.bf16.msra.mxu0 0
      %633 = vmatpush.bf16.msra.mxu0 0
      %634 = vmatpush.bf16.msra.mxu0 0
      %635 = vmatpush.bf16.msra.mxu0 0
      %636 = vmatpush.bf16.msra.mxu0 0
      %637 = vmatpush.bf16.msra.mxu0 0
      %638 = vmatpush.bf16.msra.mxu0 0
      %639 = vmatpush.bf16.msra.mxu0 %v630
      %640 = vmatmul.bf16.gmra.mxu0 %v627
      %v641 = vpop.f32.mrf.mxu0
      %v642 = vadd.f32 0.0, %v641
      %v643 = vpop.f32.mrf.mxu0
      %v644 = vadd.f32 0.0, %v643
      %645 = vdwg.mxu0
      %v646 = vrcp.pop %v619
      %v647 = vrcp.pop %v622
      %v648 = vmul.f32 %v642, %v646
      %v649 = vmul.f32 %v644, %v647
      %651 = vrot.lane.b32.xlu0 %v649, 8
      %v652 = vpop.permute.xlu0 %651
      %v654 = vsel %vm419, %v648, %v652
      %v655 = vpack.c.bf16 %v654, %v654
      %v658 = vunpack.c.l.b16 %v465
      %v659 = vunpack.c.l.b16 %v466
      %v660 = vpack.c.b16 %v659, %v658
      %v663 = vsel %vm405, %v655, 0
      %665 = vmatpush.bf16.msra.mxu0 0
      %666 = vmatpush.bf16.msra.mxu0 0
      %667 = vmatpush.bf16.msra.mxu0 0
      %668 = vmatpush.bf16.msra.mxu0 0
      %669 = vmatpush.bf16.msra.mxu0 0
      %670 = vmatpush.bf16.msra.mxu0 0
      %671 = vmatpush.bf16.msra.mxu0 0
      %672 = vmatpush.bf16.msra.mxu0 %v660
      %673 = vmatmul.bf16.gmra.mxu0 %v663
      %v674 = vpop.f32.mrf.mxu0
      %v675 = vadd.f32 0.0, %v674
      %v676 = vpop.f32.mrf.mxu0
      %677 = vdwg.mxu0
      %v680 = vunpack.c.l.b16 %v463
      %v681 = vunpack.c.l.b16 %v464
      %v682 = vpack.c.b16 %v681, %v680
      %v685 = vsel %vm405, %v565, 0
      %687 = vmatpush.bf16.msra.mxu0 0
      %688 = vmatpush.bf16.msra.mxu0 0
      %689 = vmatpush.bf16.msra.mxu0 0
      %690 = vmatpush.bf16.msra.mxu0 0
      %691 = vmatpush.bf16.msra.mxu0 0
      %692 = vmatpush.bf16.msra.mxu0 0
      %693 = vmatpush.bf16.msra.mxu0 0
      %694 = vmatpush.bf16.msra.mxu0 %v682
      %695 = vmatmul.bf16.gmra.mxu0 %v685
      %v696 = vpop.f32.mrf.mxu0
      %v697 = vadd.f32 %v675, %v696
      %v698 = vpop.f32.mrf.mxu0
      %699 = vdwg.mxu0
      %v700 = vadd.f32 %v330, %v697
      %v701 = vpack.c.bf16 %v700, %v700
      %vm702 = vcmask 257024
      %703 = vst.msk [vmem:[%s327] sm:$0xf] %vm702, %v701
      %p704 = scmp.lt.s32.totalorder %s20, 1
      %s705 = scalar_select %p704, %s20, 1
      %s706 = smul.addr %s705, 4
      %s707 = scalar_lea.vmem %s9, %s706
      // Predicated region
      $region57: #{chatglm_decoder_layer.2} parent=55 // pred_check
        %p708 = pneg %p232
      $region58: #{chatglm_decoder_layer.2} parent=55 // pred_check_branch
        %710 = sbr.rel (%p708) target = $region60
      $region59: #{chatglm_decoder_layer.2} parent=55 // pred_region
        _
      $region60: #{chatglm_decoder_layer.2} parent=55 // pred_fallthru
        _
    $region56: #{chatglm_decoder_layer.2} parent=5 // pred_fallthru
      _
    %p711 = scmp.le.s32.totalorder 2, %s15
    // Predicated region
    $region61: #{chatglm_decoder_layer.2} parent=5 // pred_check
      %p712 = pneg %p711
    $region62: #{chatglm_decoder_layer.2} parent=5 // pred_check_branch
      %714 = sbr.rel (%p712) target = $region64
    $region63: #{chatglm_decoder_layer.2} parent=5 // pred_region
      %s715 = ssub.s32 %s15, 2
      // Predicated region
      $region65: #{chatglm_decoder_layer.2} parent=63 // pred_check
        %p716 = pneg %p238
      $region66: #{chatglm_decoder_layer.2} parent=63 // pred_check_branch
        %718 = sbr.rel (%p716) target = $region68
      $region67: #{chatglm_decoder_layer.2} parent=63 // pred_region
        %p719 = scmp.lt.s32.totalorder %s21, 1
        %s720 = scalar_select %p719, %s21, 1
        %s721 = smul.addr %s720, 4
        %s722 = scalar_lea.vmem %s9, %s721
      $region68: #{chatglm_decoder_layer.2} parent=63 // pred_fallthru
        _
    $region64: #{chatglm_decoder_layer.2} parent=5 // pred_fallthru
      _
  $region6: #{chatglm_decoder_layer.2} parent=0 // loop_footer
    %s19 = sadd.s32 1, %s15
  $region7: #{chatglm_decoder_layer.2} parent=0 // loop_footer_branch
    %14 = sbr.rel target = $region3
  $region8: #{chatglm_decoder_layer.2} parent=0 // loop_exit
    _

</llo_original>
